<compile_context>
chip_gen: v7x
topology: tpu7x:2x2x1
jax: 0.10.0
libtpu: 0.0.40
codegen_flags: <defaults>
</compile_context>

<pallas_src>
import math

import jax
import jax.numpy as jnp
from jax.experimental import pallas as pl
from jax.experimental.pallas import tpu as pltpu

# ----------------------------- synthetic config -----------------------------
BATCH = 2
SEQ = 8
HIDDEN = 32
NUM_HEADS = 2
HEAD_DIM = HIDDEN // NUM_HEADS
INTERMEDIATE = 64
NUM_LAYERS = 2
VOCAB = 64
MAX_POS = 16
LN_EPS = 1e-12
HEAD_DIMS_OUT = [4] * 13 + [2]          # 14 classification heads
TOTAL_OUT = sum(HEAD_DIMS_OUT)          # 54
PAD_OUT = 128                           # lane-pad classifier output -> unmasked lanes
BS = BATCH * SEQ

# ~56 MB: fits under v7x's 64 MiB physical VMEM with headroom, well under
# v5e/v6e's 128 MiB.  TODO(synk): retune per generation at production shapes.
VMEM_LIMIT_BYTES = 56 * 1024 * 1024


# ------------------------------ in-kernel math ------------------------------
def _gelu(x):
    # tanh-form GELU: the transcendental runs on the EUP (free co-issue slot)
    # instead of a ~10-op VALU erf polynomial; matches exact erf GELU to ~1e-3.
    c = math.sqrt(2.0 / math.pi)
    return 0.5 * x * (1.0 + jnp.tanh(c * (x + 0.044715 * (x * x * x))))


def _layernorm(x, gamma, beta):
    # f32 statistics (rsqrt runs on the EUP).
    mu = jnp.mean(x, axis=-1, keepdims=True)
    xc = x - mu
    var = jnp.mean(xc * xc, axis=-1, keepdims=True)
    return xc * jax.lax.rsqrt(var + LN_EPS) * gamma + beta


# --------------------------- fused BERT + heads kernel -----------------------
def fused_bert_kernel(x_ref, bias_ref, emb_g_ref, emb_b_ref,
                      wq_ref, bq_ref, wk_ref, bk_ref, wv_ref, bv_ref,
                      wo_ref, bo_ref, g1_ref, b1_ref,
                      wi_ref, bi_ref, wo2_ref, bo2_ref, g2_ref, b2_ref,
                      hw_ref, hb_ref,
                      logits_ref, act_ref, ctx_ref):
    layer = pl.program_id(0)

    # ---- layer-0 prologue: embedding LayerNorm into the resident activation.
    @pl.when(layer == 0)
    def _():
        act_ref[...] = _layernorm(x_ref[...], emb_g_ref[...], emb_b_ref[...])

    x = act_ref[...]                          # (B*S, H) f32, VMEM-resident
    x_bf = x.astype(jnp.bfloat16)             # MXU operand only

    # ---- self-attention (whole batch in one block) -------------------------
    q = jnp.dot(x_bf, wq_ref[0], preferred_element_type=jnp.float32) + bq_ref[0]
    k = jnp.dot(x_bf, wk_ref[0], preferred_element_type=jnp.float32) + bk_ref[0]
    v = jnp.dot(x_bf, wv_ref[0], preferred_element_type=jnp.float32) + bv_ref[0]
    q3 = q.reshape(BATCH, SEQ, HIDDEN)
    k3 = k.reshape(BATCH, SEQ, HIDDEN)
    v3 = v.reshape(BATCH, SEQ, HIDDEN)

    # Additive mask bias precomputed in the wrapper; broadcast once per layer
    # (hoisted out of the per-head loop -- broadcast_in_dim is not CSE'd).
    att_bias = jnp.broadcast_to(bias_ref[...], (BATCH, SEQ, SEQ))

    scale = 1.0 / math.sqrt(HEAD_DIM)
    # Static unroll keeps lane offsets static; each head's context is stored
    # into ctx_ref immediately, so its live range ends here (no list+concat).
    for h in range(NUM_HEADS):
        lo = h * HEAD_DIM
        qh = q3[:, :, lo:lo + HEAD_DIM].astype(jnp.bfloat16)
        kh = k3[:, :, lo:lo + HEAD_DIM].astype(jnp.bfloat16)
        vh = v3[:, :, lo:lo + HEAD_DIM].astype(jnp.bfloat16)
        s = jnp.einsum("bqd,bkd->bqk", qh, kh,
                       preferred_element_type=jnp.float32) * scale + att_bias
        s = s - jnp.max(s, axis=-1, keepdims=True)
        p = jnp.exp(s)                                           # f32 softmax
        p = p * pl.reciprocal(jnp.sum(p, axis=-1, keepdims=True), approx=True)
        ctx_h = jnp.einsum("bqk,bkd->bqd", p.astype(jnp.bfloat16), vh,
                           preferred_element_type=jnp.float32)
        ctx_ref[:, lo:lo + HEAD_DIM] = ctx_h.reshape(BS, HEAD_DIM)

    # concat(head contexts) already materialized in ctx_ref -> ONE full-width
    # (B*S,H)@(H,H) output-projection matmul.
    attn = jnp.dot(ctx_ref[...].astype(jnp.bfloat16), wo_ref[0],
                   preferred_element_type=jnp.float32) + bo_ref[0]
    h1 = _layernorm(x + attn, g1_ref[0], b1_ref[0])

    # ---- FFN (GELU in f32; only MXU operands are bf16) ---------------------
    # TODO(synk): tile the I dimension here for v7x at production shapes.
    inter = _gelu(jnp.dot(h1.astype(jnp.bfloat16), wi_ref[0],
                          preferred_element_type=jnp.float32) + bi_ref[0])
    ffn = jnp.dot(inter.astype(jnp.bfloat16), wo2_ref[0],
                  preferred_element_type=jnp.float32) + bo2_ref[0]
    act_ref[...] = _layernorm(h1 + ffn, g2_ref[0], b2_ref[0])

    # ---- last-layer epilogue: strided CLS gather + fused 14-head classifier.
    # nn.Dropout(p=0.1) on cls_hidden is identity at inference.
    @pl.when(layer == pl.num_programs(0) - 1)
    def _():
        # CLS token sits at row b*SEQ for each batch item -> strided sublane read.
        cls = act_ref[pl.ds(0, BATCH, stride=SEQ), :]            # (B, H)
        logits_ref[...] = (jnp.dot(cls.astype(jnp.bfloat16), hw_ref[...],
                                   preferred_element_type=jnp.float32)
                           + hb_ref[...])


# ------------------------------ parameter init ------------------------------
def init_params(key):
    keys = iter(jax.random.split(key, 64))

    def dense(*shape, dtype=jnp.float32):
        return (jax.random.normal(next(keys), shape, jnp.float32) * 0.02).astype(dtype)

    L, H, I = NUM_LAYERS, HIDDEN, INTERMEDIATE
    bf = jnp.bfloat16
    params = {
        "word_emb": dense(VOCAB, H),
        "pos_emb": dense(MAX_POS, H),
        "type_emb": dense(2, H),
        "emb_g": jnp.ones((1, H), jnp.float32),
        "emb_b": jnp.zeros((1, H), jnp.float32),
        # Per-layer weights stacked on a leading layer axis (one pallas_call);
        # stored (in_features, out_features) so y = x @ W + b.  Matmul weights
        # are bf16 (halves weight DMA + VMEM); biases / LN params stay f32.
        "wq": dense(L, H, H, dtype=bf), "bq": jnp.zeros((L, 1, H), jnp.float32),
        "wk": dense(L, H, H, dtype=bf), "bk": jnp.zeros((L, 1, H), jnp.float32),
        "wv": dense(L, H, H, dtype=bf), "bv": jnp.zeros((L, 1, H), jnp.float32),
        "wo": dense(L, H, H, dtype=bf), "bo": jnp.zeros((L, 1, H), jnp.float32),
        "g1": jnp.ones((L, 1, H), jnp.float32),
        "b1": jnp.zeros((L, 1, H), jnp.float32),
        "wi": dense(L, H, I, dtype=bf), "bi": jnp.zeros((L, 1, I), jnp.float32),
        "wo2": dense(L, I, H, dtype=bf), "bo2": jnp.zeros((L, 1, H), jnp.float32),
        "g2": jnp.ones((L, 1, H), jnp.float32),
        "b2": jnp.zeros((L, 1, H), jnp.float32),
    }

    head_ws = [dense(H, d) for d in HEAD_DIMS_OUT]
    head_bs = [dense(d) for d in HEAD_DIMS_OUT]
    hw = jnp.concatenate(head_ws, axis=1)                    # (H, 54)
    hb = jnp.concatenate(head_bs).reshape(1, TOTAL_OUT)      # (1, 54)
    # Lane-pad 54 -> 128 so the classifier matmul/store is full-lane.
    params["head_w"] = jnp.pad(hw, ((0, 0), (0, PAD_OUT - TOTAL_OUT))).astype(bf)
    params["head_b"] = jnp.pad(hb, ((0, 0), (0, PAD_OUT - TOTAL_OUT)))
    return params


# --------------------------------- forward ----------------------------------
def bert_labeler_forward(params, source_padded, attention_mask):
    B, S = source_padded.shape
    H, I = HIDDEN, INTERMEDIATE

    # Embedding gathers stay in plain JAX (gather glue); LayerNorm is in-kernel.
    # Pre-flatten to (B*S, H) so the kernel never reshapes the input block.
    x_emb = (params["word_emb"][source_padded]
             + params["pos_emb"][jnp.arange(S)][None, :, :]
             + params["type_emb"][0][None, None, :]).astype(jnp.float32)
    x_emb = x_emb.reshape(B * S, H)

    # HuggingFace extended attention mask -> additive bias, computed ONCE here:
    # 0 for real tokens, -1e4 for padding (older-HF constant).
    attn_bias = ((1.0 - attention_mask.astype(jnp.float32)) * -10000.0)[:, None, :]

    def fixed(shape):
        return pl.BlockSpec(shape, lambda l, n=len(shape): (0,) * n)

    def per_layer(*trailing):
        n = len(trailing)
        return pl.BlockSpec((1,) + trailing, lambda l, n=n: (l,) + (0,) * n)

    in_specs = [
        fixed((B * S, H)),                   # x_emb (read once at layer 0)
        fixed((B, 1, S)),                    # additive attention bias
        fixed((1, H)), fixed((1, H)),        # embedding LN gamma/beta
        per_layer(H, H), per_layer(1, H),    # Wq, bq
        per_layer(H, H), per_layer(1, H),    # Wk, bk
        per_layer(H, H), per_layer(1, H),    # Wv, bv
        per_layer(H, H), per_layer(1, H),    # Wo, bo
        per_layer(1, H), per_layer(1, H),    # LN1 gamma, beta
        per_layer(H, I), per_layer(1, I),    # FFN in
        per_layer(I, H), per_layer(1, H),    # FFN out
        per_layer(1, H), per_layer(1, H),    # LN2 gamma, beta
        fixed((H, PAD_OUT)), fixed((1, PAD_OUT)),   # fused classifier heads
    ]

    grid_spec = pltpu.PrefetchScalarGridSpec(
        num_scalar_prefetch=0,
        grid=(NUM_LAYERS,),                  # layers are a sequential chain
        in_specs=in_specs,
        # Only the CLS logits leave the kernel: (B, 128) lane-padded.
        out_specs=pl.BlockSpec((B, PAD_OUT), lambda l: (0, 0)),
        scratch_shapes=[
            pltpu.VMEM((B * S, H), jnp.float32),   # resident activation
            pltpu.VMEM((B * S, H), jnp.float32),   # per-layer attention ctx
        ],
    )

    cls_logits_pad = pl.pallas_call(
        fused_bert_kernel,
        grid_spec=grid_spec,
        out_shape=jax.ShapeDtypeStruct((B, PAD_OUT), jnp.float32),
        compiler_params=pltpu.CompilerParams(
            dimension_semantics=("arbitrary",),
            vmem_limit_bytes=VMEM_LIMIT_BYTES,
        ),
    )(x_emb, attn_bias, params["emb_g"], params["emb_b"],
      params["wq"], params["bq"], params["wk"], params["bk"],
      params["wv"], params["bv"], params["wo"], params["bo"],
      params["g1"], params["b1"], params["wi"], params["bi"],
      params["wo2"], params["bo2"], params["g2"], params["b2"],
      params["head_w"], params["head_b"])

    # Drop lane padding, split into the 14 per-condition heads.
    cls_logits = cls_logits_pad[:, :TOTAL_OUT]
    out = []
    off = 0
    for d in HEAD_DIMS_OUT:
        out.append(cls_logits[:, off:off + d])
        off += d
    return out


# ----------------------------------- main ------------------------------------
if __name__ == "__main__":
    key = jax.random.PRNGKey(0)
    pkey, tkey = jax.random.split(key)
    params = init_params(pkey)

    source_padded = jax.random.randint(tkey, (BATCH, SEQ), 0, VOCAB, dtype=jnp.int32)
    attention_mask = jnp.ones((BATCH, SEQ), jnp.int32).at[1, 6:].set(0)  # pad tail of item 1

    out = bert_labeler_forward(params, source_padded, attention_mask)
    out = jax.block_until_ready(out)

    assert len(out) == 14
    assert all(o.shape == (BATCH, 4) for o in out[:13])
    assert out[13].shape == (BATCH, 2)
    print("KERNEL_OK")
</pallas_src>

<mosaic_0001>
module attributes {stable_mosaic.version = 11 : i64} {
  func.func @fused_bert_kernel(%arg0: i32, %arg1: memref<16x32xf32, #tpu.memory_space<vmem>>, %arg2: memref<2x1x8xf32, #tpu.memory_space<vmem>>, %arg3: memref<1x32xf32, #tpu.memory_space<vmem>>, %arg4: memref<1x32xf32, #tpu.memory_space<vmem>>, %arg5: memref<1x32x32xbf16, #tpu.memory_space<vmem>>, %arg6: memref<1x1x32xf32, #tpu.memory_space<vmem>>, %arg7: memref<1x32x32xbf16, #tpu.memory_space<vmem>>, %arg8: memref<1x1x32xf32, #tpu.memory_space<vmem>>, %arg9: memref<1x32x32xbf16, #tpu.memory_space<vmem>>, %arg10: memref<1x1x32xf32, #tpu.memory_space<vmem>>, %arg11: memref<1x32x32xbf16, #tpu.memory_space<vmem>>, %arg12: memref<1x1x32xf32, #tpu.memory_space<vmem>>, %arg13: memref<1x1x32xf32, #tpu.memory_space<vmem>>, %arg14: memref<1x1x32xf32, #tpu.memory_space<vmem>>, %arg15: memref<1x32x64xbf16, #tpu.memory_space<vmem>>, %arg16: memref<1x1x64xf32, #tpu.memory_space<vmem>>, %arg17: memref<1x64x32xbf16, #tpu.memory_space<vmem>>, %arg18: memref<1x1x32xf32, #tpu.memory_space<vmem>>, %arg19: memref<1x1x32xf32, #tpu.memory_space<vmem>>, %arg20: memref<1x1x32xf32, #tpu.memory_space<vmem>>, %arg21: memref<32x128xbf16, #tpu.memory_space<vmem>>, %arg22: memref<1x128xf32, #tpu.memory_space<vmem>>, %arg23: memref<2x128xf32, #tpu.memory_space<vmem>>, %arg24: memref<16x32xf32, #tpu.memory_space<vmem>>, %arg25: memref<16x32xf32, #tpu.memory_space<vmem>>) attributes {dimension_semantics = [#tpu.dimension_semantics<arbitrary>], iteration_bounds = array<i64: 2>, scalar_prefetch = 0 : i64, scratch_operands = 2 : i64, tpu.core_type = #tpu.core_type<tc>, window_params = [{pipeline_mode = #tpu.pipeline_mode<synchronous>, transform_indices = @transform_0, window_bounds = array<i64: 16, 32>}, {pipeline_mode = #tpu.pipeline_mode<synchronous>, transform_indices = @transform_1, window_bounds = array<i64: 2, 1, 8>}, {pipeline_mode = #tpu.pipeline_mode<synchronous>, transform_indices = @transform_2, window_bounds = array<i64: 1, 32>}, {pipeline_mode = #tpu.pipeline_mode<synchronous>, transform_indices = @transform_3, window_bounds = array<i64: 1, 32>}, {transform_indices = @transform_4, window_bounds = array<i64: 1, 32, 32>}, {transform_indices = @transform_5, window_bounds = array<i64: 1, 1, 32>}, {transform_indices = @transform_6, window_bounds = array<i64: 1, 32, 32>}, {transform_indices = @transform_7, window_bounds = array<i64: 1, 1, 32>}, {transform_indices = @transform_8, window_bounds = array<i64: 1, 32, 32>}, {transform_indices = @transform_9, window_bounds = array<i64: 1, 1, 32>}, {transform_indices = @transform_10, window_bounds = array<i64: 1, 32, 32>}, {transform_indices = @transform_11, window_bounds = array<i64: 1, 1, 32>}, {transform_indices = @transform_12, window_bounds = array<i64: 1, 1, 32>}, {transform_indices = @transform_13, window_bounds = array<i64: 1, 1, 32>}, {transform_indices = @transform_14, window_bounds = array<i64: 1, 32, 64>}, {transform_indices = @transform_15, window_bounds = array<i64: 1, 1, 64>}, {transform_indices = @transform_16, window_bounds = array<i64: 1, 64, 32>}, {transform_indices = @transform_17, window_bounds = array<i64: 1, 1, 32>}, {transform_indices = @transform_18, window_bounds = array<i64: 1, 1, 32>}, {transform_indices = @transform_19, window_bounds = array<i64: 1, 1, 32>}, {pipeline_mode = #tpu.pipeline_mode<synchronous>, transform_indices = @transform_20, window_bounds = array<i64: 32, 128>}, {pipeline_mode = #tpu.pipeline_mode<synchronous>, transform_indices = @transform_21, window_bounds = array<i64: 1, 128>}, {pipeline_mode = #tpu.pipeline_mode<synchronous>, transform_indices = @transform_22, window_bounds = array<i64: 2, 128>}]} {
    %c0_i32 = arith.constant 0 : i32
    %0 = arith.cmpi eq, %arg0, %c0_i32 : i32
    %1 = arith.extui %0 : i1 to i32
    %c0_i32_0 = arith.constant 0 : i32
    %2 = arith.cmpi ne, %1, %c0_i32_0 : i32
    scf.if %2 {
      %c0_90 = arith.constant 0 : index
      %c0_91 = arith.constant 0 : index
      %172 = vector.load %arg1[%c0_90, %c0_91] : memref<16x32xf32, #tpu.memory_space<vmem>>, vector<16x32xf32>
      %c0_92 = arith.constant 0 : index
      %c0_93 = arith.constant 0 : index
      %173 = vector.load %arg3[%c0_92, %c0_93] : memref<1x32xf32, #tpu.memory_space<vmem>>, vector<1x32xf32>
      %c0_94 = arith.constant 0 : index
      %c0_95 = arith.constant 0 : index
      %174 = vector.load %arg4[%c0_94, %c0_95] : memref<1x32xf32, #tpu.memory_space<vmem>>, vector<1x32xf32>
      %cst_96 = arith.constant dense<0.000000e+00> : vector<16xf32>
      %175 = vector.multi_reduction <add>, %172, %cst_96 [1] : vector<16x32xf32> to vector<16xf32>
      %176 = vector.shape_cast %175 : vector<16xf32> to vector<16x1xf32>
      %cst_97 = arith.constant 3.200000e+01 : f32
      %177 = vector.broadcast %cst_97 : f32 to vector<16x1xf32>
      %178 = arith.divf %176, %177 : vector<16x1xf32>
      %179 = vector.broadcast %178 : vector<16x1xf32> to vector<16x32xf32>
      %180 = arith.subf %172, %179 : vector<16x32xf32>
      %181 = arith.mulf %180, %180 : vector<16x32xf32>
      %cst_98 = arith.constant dense<0.000000e+00> : vector<16xf32>
      %182 = vector.multi_reduction <add>, %181, %cst_98 [1] : vector<16x32xf32> to vector<16xf32>
      %183 = vector.shape_cast %182 : vector<16xf32> to vector<16x1xf32>
      %cst_99 = arith.constant 3.200000e+01 : f32
      %184 = vector.broadcast %cst_99 : f32 to vector<16x1xf32>
      %185 = arith.divf %183, %184 : vector<16x1xf32>
      %cst_100 = arith.constant 9.99999996E-13 : f32
      %186 = vector.broadcast %cst_100 : f32 to vector<16x1xf32>
      %187 = arith.addf %185, %186 : vector<16x1xf32>
      %188 = math.rsqrt %187 : vector<16x1xf32>
      %189 = vector.broadcast %188 : vector<16x1xf32> to vector<16x32xf32>
      %190 = arith.mulf %180, %189 : vector<16x32xf32>
      %191 = vector.broadcast %173 : vector<1x32xf32> to vector<16x32xf32>
      %192 = arith.mulf %190, %191 : vector<16x32xf32>
      %193 = vector.broadcast %174 : vector<1x32xf32> to vector<16x32xf32>
      %194 = arith.addf %192, %193 : vector<16x32xf32>
      %c0_101 = arith.constant 0 : index
      %c0_102 = arith.constant 0 : index
      %195 = vector.load %arg24[%c0_101, %c0_102] : memref<16x32xf32, #tpu.memory_space<vmem>>, vector<16x32xf32>
      tpu.vector_store %arg24[%c0_101, %c0_102], %194 {strides = array<i32>} : memref<16x32xf32, #tpu.memory_space<vmem>>, vector<16x32xf32>,
    } else {
    }
    %c0 = arith.constant 0 : index
    %c0_1 = arith.constant 0 : index
    %3 = vector.load %arg24[%c0, %c0_1] : memref<16x32xf32, #tpu.memory_space<vmem>>, vector<16x32xf32>
    %4 = arith.truncf %3 : vector<16x32xf32> to vector<16x32xbf16>
    %c0_2 = arith.constant 0 : index
    %c0_3 = arith.constant 0 : index
    %c0_4 = arith.constant 0 : index
    %5 = vector.load %arg5[%c0_2, %c0_3, %c0_4] : memref<1x32x32xbf16, #tpu.memory_space<vmem>>, vector<1x32x32xbf16>
    %6 = vector.shape_cast %5 : vector<1x32x32xbf16> to vector<32x32xbf16>
    %cst = arith.constant dense<0.000000e+00> : vector<16x32xf32>
    %7 = tpu.matmul %4, %6, %cst {dimension_numbers = #tpu.dot_dimension_numbers<[1], [0], [0], [1], [0, 0, 1, 1], [], []>} : vector<16x32xbf16>, vector<32x32xbf16>, vector<16x32xf32> -> vector<16x32xf32>
    %c0_5 = arith.constant 0 : index
    %c0_6 = arith.constant 0 : index
    %c0_7 = arith.constant 0 : index
    %8 = vector.load %arg6[%c0_5, %c0_6, %c0_7] : memref<1x1x32xf32, #tpu.memory_space<vmem>>, vector<1x1x32xf32>
    %9 = vector.shape_cast %8 : vector<1x1x32xf32> to vector<1x32xf32>
    %10 = vector.broadcast %9 : vector<1x32xf32> to vector<16x32xf32>
    %11 = arith.addf %7, %10 : vector<16x32xf32>
    %c0_8 = arith.constant 0 : index
    %c0_9 = arith.constant 0 : index
    %c0_10 = arith.constant 0 : index
    %12 = vector.load %arg7[%c0_8, %c0_9, %c0_10] : memref<1x32x32xbf16, #tpu.memory_space<vmem>>, vector<1x32x32xbf16>
    %13 = vector.shape_cast %12 : vector<1x32x32xbf16> to vector<32x32xbf16>
    %cst_11 = arith.constant dense<0.000000e+00> : vector<16x32xf32>
    %14 = tpu.matmul %4, %13, %cst_11 {dimension_numbers = #tpu.dot_dimension_numbers<[1], [0], [0], [1], [0, 0, 1, 1], [], []>} : vector<16x32xbf16>, vector<32x32xbf16>, vector<16x32xf32> -> vector<16x32xf32>
    %c0_12 = arith.constant 0 : index
    %c0_13 = arith.constant 0 : index
    %c0_14 = arith.constant 0 : index
    %15 = vector.load %arg8[%c0_12, %c0_13, %c0_14] : memref<1x1x32xf32, #tpu.memory_space<vmem>>, vector<1x1x32xf32>
    %16 = vector.shape_cast %15 : vector<1x1x32xf32> to vector<1x32xf32>
    %17 = vector.broadcast %16 : vector<1x32xf32> to vector<16x32xf32>
    %18 = arith.addf %14, %17 : vector<16x32xf32>
    %c0_15 = arith.constant 0 : index
    %c0_16 = arith.constant 0 : index
    %c0_17 = arith.constant 0 : index
    %19 = vector.load %arg9[%c0_15, %c0_16, %c0_17] : memref<1x32x32xbf16, #tpu.memory_space<vmem>>, vector<1x32x32xbf16>
    %20 = vector.shape_cast %19 : vector<1x32x32xbf16> to vector<32x32xbf16>
    %cst_18 = arith.constant dense<0.000000e+00> : vector<16x32xf32>
    %21 = tpu.matmul %4, %20, %cst_18 {dimension_numbers = #tpu.dot_dimension_numbers<[1], [0], [0], [1], [0, 0, 1, 1], [], []>} : vector<16x32xbf16>, vector<32x32xbf16>, vector<16x32xf32> -> vector<16x32xf32>
    %c0_19 = arith.constant 0 : index
    %c0_20 = arith.constant 0 : index
    %c0_21 = arith.constant 0 : index
    %22 = vector.load %arg10[%c0_19, %c0_20, %c0_21] : memref<1x1x32xf32, #tpu.memory_space<vmem>>, vector<1x1x32xf32>
    %23 = vector.shape_cast %22 : vector<1x1x32xf32> to vector<1x32xf32>
    %24 = vector.broadcast %23 : vector<1x32xf32> to vector<16x32xf32>
    %25 = arith.addf %21, %24 : vector<16x32xf32>
    %26 = vector.shape_cast %11 : vector<16x32xf32> to vector<2x8x32xf32>
    %27 = vector.shape_cast %18 : vector<16x32xf32> to vector<2x8x32xf32>
    %28 = vector.shape_cast %25 : vector<16x32xf32> to vector<2x8x32xf32>
    %c0_22 = arith.constant 0 : index
    %c0_23 = arith.constant 0 : index
    %c0_24 = arith.constant 0 : index
    %29 = vector.load %arg2[%c0_22, %c0_23, %c0_24] : memref<2x1x8xf32, #tpu.memory_space<vmem>>, vector<2x1x8xf32>
    %30 = vector.shape_cast %29 : vector<2x1x8xf32> to vector<2x1x8xf32>
    %31 = vector.broadcast %30 : vector<2x1x8xf32> to vector<2x8x8xf32>
    %32 = vector.extract_strided_slice %26 {offsets = [0, 0, 0], sizes = [2, 8, 16], strides = [1, 1, 1]} : vector<2x8x32xf32> to vector<2x8x16xf32>
    %33 = arith.truncf %32 : vector<2x8x16xf32> to vector<2x8x16xbf16>
    %34 = vector.extract_strided_slice %27 {offsets = [0, 0, 0], sizes = [2, 8, 16], strides = [1, 1, 1]} : vector<2x8x32xf32> to vector<2x8x16xf32>
    %35 = arith.truncf %34 : vector<2x8x16xf32> to vector<2x8x16xbf16>
    %36 = vector.extract_strided_slice %28 {offsets = [0, 0, 0], sizes = [2, 8, 16], strides = [1, 1, 1]} : vector<2x8x32xf32> to vector<2x8x16xf32>
    %37 = arith.truncf %36 : vector<2x8x16xf32> to vector<2x8x16xbf16>
    "tpu.trace_start"() <{level = 10 : i32, message = "bqd,bkd->bqk"}> : () -> ()
    %cst_25 = arith.constant dense<0.000000e+00> : vector<2x8x8xf32>
    %38 = tpu.matmul %33, %35, %cst_25 {dimension_numbers = #tpu.dot_dimension_numbers<[2], [2], [1], [1], [0, 0, 0, 1, 1, 1], [0], [0]>} : vector<2x8x16xbf16>, vector<2x8x16xbf16>, vector<2x8x8xf32> -> vector<2x8x8xf32>
    "tpu.trace_stop"() : () -> ()
    %cst_26 = arith.constant 2.500000e-01 : f32
    %39 = vector.broadcast %cst_26 : f32 to vector<2x8x8xf32>
    %40 = arith.mulf %38, %39 : vector<2x8x8xf32>
    %41 = arith.addf %40, %31 : vector<2x8x8xf32>
    %cst_27 = arith.constant dense<0xFF800000> : vector<2x8xf32>
    %42 = vector.multi_reduction <maximumf>, %41, %cst_27 [2] : vector<2x8x8xf32> to vector<2x8xf32>
    %43 = vector.shape_cast %42 : vector<2x8xf32> to vector<2x8x1xf32>
    %44 = vector.broadcast %43 : vector<2x8x1xf32> to vector<2x8x8xf32>
    %45 = arith.subf %41, %44 : vector<2x8x8xf32>
    %46 = math.exp %45 : vector<2x8x8xf32>
    %cst_28 = arith.constant dense<0.000000e+00> : vector<2x8xf32>
    %47 = vector.multi_reduction <add>, %46, %cst_28 [2] : vector<2x8x8xf32> to vector<2x8xf32>
    %48 = vector.shape_cast %47 : vector<2x8xf32> to vector<2x8x1xf32>
    %49 = tpu.reciprocal %48 {approx = true} : vector<2x8x1xf32> -> vector<2x8x1xf32>
    %50 = vector.broadcast %49 : vector<2x8x1xf32> to vector<2x8x8xf32>
    %51 = arith.mulf %46, %50 : vector<2x8x8xf32>
    %52 = arith.truncf %51 : vector<2x8x8xf32> to vector<2x8x8xbf16>
    "tpu.trace_start"() <{level = 10 : i32, message = "bqk,bkd->bqd"}> : () -> ()
    %cst_29 = arith.constant dense<0.000000e+00> : vector<2x8x16xf32>
    %53 = tpu.matmul %52, %37, %cst_29 {dimension_numbers = #tpu.dot_dimension_numbers<[2], [1], [1], [2], [0, 0, 0, 1, 1, 2], [0], [0]>} : vector<2x8x8xbf16>, vector<2x8x16xbf16>, vector<2x8x16xf32> -> vector<2x8x16xf32>
    "tpu.trace_stop"() : () -> ()
    %54 = vector.shape_cast %53 : vector<2x8x16xf32> to vector<16x16xf32>
    %c0_30 = arith.constant 0 : index
    %c0_31 = arith.constant 0 : index
    %55 = vector.load %arg25[%c0_30, %c0_31] : memref<16x32xf32, #tpu.memory_space<vmem>>, vector<16x16xf32>
    tpu.vector_store %arg25[%c0_30, %c0_31], %54 {strides = array<i32>} : memref<16x32xf32, #tpu.memory_space<vmem>>, vector<16x16xf32>,
    %56 = vector.extract_strided_slice %26 {offsets = [0, 0, 16], sizes = [2, 8, 16], strides = [1, 1, 1]} : vector<2x8x32xf32> to vector<2x8x16xf32>
    %57 = arith.truncf %56 : vector<2x8x16xf32> to vector<2x8x16xbf16>
    %58 = vector.extract_strided_slice %27 {offsets = [0, 0, 16], sizes = [2, 8, 16], strides = [1, 1, 1]} : vector<2x8x32xf32> to vector<2x8x16xf32>
    %59 = arith.truncf %58 : vector<2x8x16xf32> to vector<2x8x16xbf16>
    %60 = vector.extract_strided_slice %28 {offsets = [0, 0, 16], sizes = [2, 8, 16], strides = [1, 1, 1]} : vector<2x8x32xf32> to vector<2x8x16xf32>
    %61 = arith.truncf %60 : vector<2x8x16xf32> to vector<2x8x16xbf16>
    "tpu.trace_start"() <{level = 10 : i32, message = "bqd,bkd->bqk"}> : () -> ()
    %cst_32 = arith.constant dense<0.000000e+00> : vector<2x8x8xf32>
    %62 = tpu.matmul %57, %59, %cst_32 {dimension_numbers = #tpu.dot_dimension_numbers<[2], [2], [1], [1], [0, 0, 0, 1, 1, 1], [0], [0]>} : vector<2x8x16xbf16>, vector<2x8x16xbf16>, vector<2x8x8xf32> -> vector<2x8x8xf32>
    "tpu.trace_stop"() : () -> ()
    %cst_33 = arith.constant 2.500000e-01 : f32
    %63 = vector.broadcast %cst_33 : f32 to vector<2x8x8xf32>
    %64 = arith.mulf %62, %63 : vector<2x8x8xf32>
    %65 = arith.addf %64, %31 : vector<2x8x8xf32>
    %cst_34 = arith.constant dense<0xFF800000> : vector<2x8xf32>
    %66 = vector.multi_reduction <maximumf>, %65, %cst_34 [2] : vector<2x8x8xf32> to vector<2x8xf32>
    %67 = vector.shape_cast %66 : vector<2x8xf32> to vector<2x8x1xf32>
    %68 = vector.broadcast %67 : vector<2x8x1xf32> to vector<2x8x8xf32>
    %69 = arith.subf %65, %68 : vector<2x8x8xf32>
    %70 = math.exp %69 : vector<2x8x8xf32>
    %cst_35 = arith.constant dense<0.000000e+00> : vector<2x8xf32>
    %71 = vector.multi_reduction <add>, %70, %cst_35 [2] : vector<2x8x8xf32> to vector<2x8xf32>
    %72 = vector.shape_cast %71 : vector<2x8xf32> to vector<2x8x1xf32>
    %73 = tpu.reciprocal %72 {approx = true} : vector<2x8x1xf32> -> vector<2x8x1xf32>
    %74 = vector.broadcast %73 : vector<2x8x1xf32> to vector<2x8x8xf32>
    %75 = arith.mulf %70, %74 : vector<2x8x8xf32>
    %76 = arith.truncf %75 : vector<2x8x8xf32> to vector<2x8x8xbf16>
    "tpu.trace_start"() <{level = 10 : i32, message = "bqk,bkd->bqd"}> : () -> ()
    %cst_36 = arith.constant dense<0.000000e+00> : vector<2x8x16xf32>
    %77 = tpu.matmul %76, %61, %cst_36 {dimension_numbers = #tpu.dot_dimension_numbers<[2], [1], [1], [2], [0, 0, 0, 1, 1, 2], [0], [0]>} : vector<2x8x8xbf16>, vector<2x8x16xbf16>, vector<2x8x16xf32> -> vector<2x8x16xf32>
    "tpu.trace_stop"() : () -> ()
    %78 = vector.shape_cast %77 : vector<2x8x16xf32> to vector<16x16xf32>
    %c0_37 = arith.constant 0 : index
    %c16 = arith.constant 16 : index
    %79 = vector.load %arg25[%c0_37, %c16] : memref<16x32xf32, #tpu.memory_space<vmem>>, vector<16x16xf32>
    tpu.vector_store %arg25[%c0_37, %c16], %78 {strides = array<i32>} : memref<16x32xf32, #tpu.memory_space<vmem>>, vector<16x16xf32>,
    %c0_38 = arith.constant 0 : index
    %c0_39 = arith.constant 0 : index
    %80 = vector.load %arg25[%c0_38, %c0_39] : memref<16x32xf32, #tpu.memory_space<vmem>>, vector<16x32xf32>
    %81 = arith.truncf %80 : vector<16x32xf32> to vector<16x32xbf16>
    %c0_40 = arith.constant 0 : index
    %c0_41 = arith.constant 0 : index
    %c0_42 = arith.constant 0 : index
    %82 = vector.load %arg11[%c0_40, %c0_41, %c0_42] : memref<1x32x32xbf16, #tpu.memory_space<vmem>>, vector<1x32x32xbf16>
    %83 = vector.shape_cast %82 : vector<1x32x32xbf16> to vector<32x32xbf16>
    %cst_43 = arith.constant dense<0.000000e+00> : vector<16x32xf32>
    %84 = tpu.matmul %81, %83, %cst_43 {dimension_numbers = #tpu.dot_dimension_numbers<[1], [0], [0], [1], [0, 0, 1, 1], [], []>} : vector<16x32xbf16>, vector<32x32xbf16>, vector<16x32xf32> -> vector<16x32xf32>
    %c0_44 = arith.constant 0 : index
    %c0_45 = arith.constant 0 : index
    %c0_46 = arith.constant 0 : index
    %85 = vector.load %arg12[%c0_44, %c0_45, %c0_46] : memref<1x1x32xf32, #tpu.memory_space<vmem>>, vector<1x1x32xf32>
    %86 = vector.shape_cast %85 : vector<1x1x32xf32> to vector<1x32xf32>
    %87 = vector.broadcast %86 : vector<1x32xf32> to vector<16x32xf32>
    %88 = arith.addf %84, %87 : vector<16x32xf32>
    %89 = arith.addf %3, %88 : vector<16x32xf32>
    %c0_47 = arith.constant 0 : index
    %c0_48 = arith.constant 0 : index
    %c0_49 = arith.constant 0 : index
    %90 = vector.load %arg13[%c0_47, %c0_48, %c0_49] : memref<1x1x32xf32, #tpu.memory_space<vmem>>, vector<1x1x32xf32>
    %91 = vector.shape_cast %90 : vector<1x1x32xf32> to vector<1x32xf32>
    %c0_50 = arith.constant 0 : index
    %c0_51 = arith.constant 0 : index
    %c0_52 = arith.constant 0 : index
    %92 = vector.load %arg14[%c0_50, %c0_51, %c0_52] : memref<1x1x32xf32, #tpu.memory_space<vmem>>, vector<1x1x32xf32>
    %93 = vector.shape_cast %92 : vector<1x1x32xf32> to vector<1x32xf32>
    %cst_53 = arith.constant dense<0.000000e+00> : vector<16xf32>
    %94 = vector.multi_reduction <add>, %89, %cst_53 [1] : vector<16x32xf32> to vector<16xf32>
    %95 = vector.shape_cast %94 : vector<16xf32> to vector<16x1xf32>
    %cst_54 = arith.constant 3.200000e+01 : f32
    %96 = vector.broadcast %cst_54 : f32 to vector<16x1xf32>
    %97 = arith.divf %95, %96 : vector<16x1xf32>
    %98 = vector.broadcast %97 : vector<16x1xf32> to vector<16x32xf32>
    %99 = arith.subf %89, %98 : vector<16x32xf32>
    %100 = arith.mulf %99, %99 : vector<16x32xf32>
    %cst_55 = arith.constant dense<0.000000e+00> : vector<16xf32>
    %101 = vector.multi_reduction <add>, %100, %cst_55 [1] : vector<16x32xf32> to vector<16xf32>
    %102 = vector.shape_cast %101 : vector<16xf32> to vector<16x1xf32>
    %cst_56 = arith.constant 3.200000e+01 : f32
    %103 = vector.broadcast %cst_56 : f32 to vector<16x1xf32>
    %104 = arith.divf %102, %103 : vector<16x1xf32>
    %cst_57 = arith.constant 9.99999996E-13 : f32
    %105 = vector.broadcast %cst_57 : f32 to vector<16x1xf32>
    %106 = arith.addf %104, %105 : vector<16x1xf32>
    %107 = math.rsqrt %106 : vector<16x1xf32>
    %108 = vector.broadcast %107 : vector<16x1xf32> to vector<16x32xf32>
    %109 = arith.mulf %99, %108 : vector<16x32xf32>
    %110 = vector.broadcast %91 : vector<1x32xf32> to vector<16x32xf32>
    %111 = arith.mulf %109, %110 : vector<16x32xf32>
    %112 = vector.broadcast %93 : vector<1x32xf32> to vector<16x32xf32>
    %113 = arith.addf %111, %112 : vector<16x32xf32>
    %114 = arith.truncf %113 : vector<16x32xf32> to vector<16x32xbf16>
    %c0_58 = arith.constant 0 : index
    %c0_59 = arith.constant 0 : index
    %c0_60 = arith.constant 0 : index
    %115 = vector.load %arg15[%c0_58, %c0_59, %c0_60] : memref<1x32x64xbf16, #tpu.memory_space<vmem>>, vector<1x32x64xbf16>
    %116 = vector.shape_cast %115 : vector<1x32x64xbf16> to vector<32x64xbf16>
    %cst_61 = arith.constant dense<0.000000e+00> : vector<16x64xf32>
    %117 = tpu.matmul %114, %116, %cst_61 {dimension_numbers = #tpu.dot_dimension_numbers<[1], [0], [0], [1], [0, 0, 1, 1], [], []>} : vector<16x32xbf16>, vector<32x64xbf16>, vector<16x64xf32> -> vector<16x64xf32>
    %c0_62 = arith.constant 0 : index
    %c0_63 = arith.constant 0 : index
    %c0_64 = arith.constant 0 : index
    %118 = vector.load %arg16[%c0_62, %c0_63, %c0_64] : memref<1x1x64xf32, #tpu.memory_space<vmem>>, vector<1x1x64xf32>
    %119 = vector.shape_cast %118 : vector<1x1x64xf32> to vector<1x64xf32>
    %120 = vector.broadcast %119 : vector<1x64xf32> to vector<16x64xf32>
    %121 = arith.addf %117, %120 : vector<16x64xf32>
    %cst_65 = arith.constant 5.000000e-01 : f32
    %122 = vector.broadcast %cst_65 : f32 to vector<16x64xf32>
    %123 = arith.mulf %122, %121 : vector<16x64xf32>
    %124 = arith.mulf %121, %121 : vector<16x64xf32>
    %125 = arith.mulf %124, %121 : vector<16x64xf32>
    %cst_66 = arith.constant 4.471500e-02 : f32
    %126 = vector.broadcast %cst_66 : f32 to vector<16x64xf32>
    %127 = arith.mulf %126, %125 : vector<16x64xf32>
    %128 = arith.addf %121, %127 : vector<16x64xf32>
    %cst_67 = arith.constant 0.797884583 : f32
    %129 = vector.broadcast %cst_67 : f32 to vector<16x64xf32>
    %130 = arith.mulf %129, %128 : vector<16x64xf32>
    %131 = math.tanh %130 : vector<16x64xf32>
    %cst_68 = arith.constant 1.000000e+00 : f32
    %132 = vector.broadcast %cst_68 : f32 to vector<16x64xf32>
    %133 = arith.addf %132, %131 : vector<16x64xf32>
    %134 = arith.mulf %123, %133 : vector<16x64xf32>
    %135 = arith.truncf %134 : vector<16x64xf32> to vector<16x64xbf16>
    %c0_69 = arith.constant 0 : index
    %c0_70 = arith.constant 0 : index
    %c0_71 = arith.constant 0 : index
    %136 = vector.load %arg17[%c0_69, %c0_70, %c0_71] : memref<1x64x32xbf16, #tpu.memory_space<vmem>>, vector<1x64x32xbf16>
    %137 = vector.shape_cast %136 : vector<1x64x32xbf16> to vector<64x32xbf16>
    %cst_72 = arith.constant dense<0.000000e+00> : vector<16x32xf32>
    %138 = tpu.matmul %135, %137, %cst_72 {dimension_numbers = #tpu.dot_dimension_numbers<[1], [0], [0], [1], [0, 0, 1, 1], [], []>} : vector<16x64xbf16>, vector<64x32xbf16>, vector<16x32xf32> -> vector<16x32xf32>
    %c0_73 = arith.constant 0 : index
    %c0_74 = arith.constant 0 : index
    %c0_75 = arith.constant 0 : index
    %139 = vector.load %arg18[%c0_73, %c0_74, %c0_75] : memref<1x1x32xf32, #tpu.memory_space<vmem>>, vector<1x1x32xf32>
    %140 = vector.shape_cast %139 : vector<1x1x32xf32> to vector<1x32xf32>
    %141 = vector.broadcast %140 : vector<1x32xf32> to vector<16x32xf32>
    %142 = arith.addf %138, %141 : vector<16x32xf32>
    %143 = arith.addf %113, %142 : vector<16x32xf32>
    %c0_76 = arith.constant 0 : index
    %c0_77 = arith.constant 0 : index
    %c0_78 = arith.constant 0 : index
    %144 = vector.load %arg19[%c0_76, %c0_77, %c0_78] : memref<1x1x32xf32, #tpu.memory_space<vmem>>, vector<1x1x32xf32>
    %145 = vector.shape_cast %144 : vector<1x1x32xf32> to vector<1x32xf32>
    %c0_79 = arith.constant 0 : index
    %c0_80 = arith.constant 0 : index
    %c0_81 = arith.constant 0 : index
    %146 = vector.load %arg20[%c0_79, %c0_80, %c0_81] : memref<1x1x32xf32, #tpu.memory_space<vmem>>, vector<1x1x32xf32>
    %147 = vector.shape_cast %146 : vector<1x1x32xf32> to vector<1x32xf32>
    %cst_82 = arith.constant dense<0.000000e+00> : vector<16xf32>
    %148 = vector.multi_reduction <add>, %143, %cst_82 [1] : vector<16x32xf32> to vector<16xf32>
    %149 = vector.shape_cast %148 : vector<16xf32> to vector<16x1xf32>
    %cst_83 = arith.constant 3.200000e+01 : f32
    %150 = vector.broadcast %cst_83 : f32 to vector<16x1xf32>
    %151 = arith.divf %149, %150 : vector<16x1xf32>
    %152 = vector.broadcast %151 : vector<16x1xf32> to vector<16x32xf32>
    %153 = arith.subf %143, %152 : vector<16x32xf32>
    %154 = arith.mulf %153, %153 : vector<16x32xf32>
    %cst_84 = arith.constant dense<0.000000e+00> : vector<16xf32>
    %155 = vector.multi_reduction <add>, %154, %cst_84 [1] : vector<16x32xf32> to vector<16xf32>
    %156 = vector.shape_cast %155 : vector<16xf32> to vector<16x1xf32>
    %cst_85 = arith.constant 3.200000e+01 : f32
    %157 = vector.broadcast %cst_85 : f32 to vector<16x1xf32>
    %158 = arith.divf %156, %157 : vector<16x1xf32>
    %cst_86 = arith.constant 9.99999996E-13 : f32
    %159 = vector.broadcast %cst_86 : f32 to vector<16x1xf32>
    %160 = arith.addf %158, %159 : vector<16x1xf32>
    %161 = math.rsqrt %160 : vector<16x1xf32>
    %162 = vector.broadcast %161 : vector<16x1xf32> to vector<16x32xf32>
    %163 = arith.mulf %153, %162 : vector<16x32xf32>
    %164 = vector.broadcast %145 : vector<1x32xf32> to vector<16x32xf32>
    %165 = arith.mulf %163, %164 : vector<16x32xf32>
    %166 = vector.broadcast %147 : vector<1x32xf32> to vector<16x32xf32>
    %167 = arith.addf %165, %166 : vector<16x32xf32>
    %c0_87 = arith.constant 0 : index
    %c0_88 = arith.constant 0 : index
    %168 = vector.load %arg24[%c0_87, %c0_88] : memref<16x32xf32, #tpu.memory_space<vmem>>, vector<16x32xf32>
    tpu.vector_store %arg24[%c0_87, %c0_88], %167 {strides = array<i32>} : memref<16x32xf32, #tpu.memory_space<vmem>>, vector<16x32xf32>,
    %c1_i32 = arith.constant 1 : i32
    %169 = arith.cmpi eq, %arg0, %c1_i32 : i32
    %170 = arith.extui %169 : i1 to i32
    %c0_i32_89 = arith.constant 0 : i32
    %171 = arith.cmpi ne, %170, %c0_i32_89 : i32
    scf.if %171 {
      %c0_90 = arith.constant 0 : index
      %c0_91 = arith.constant 0 : index
      %172 = tpu.strided_load %arg24[%c0_90, %c0_91] {strides = array<i32: 8, 1>} : memref<16x32xf32, #tpu.memory_space<vmem>>, vector<2x32xf32>
      %173 = arith.truncf %172 : vector<2x32xf32> to vector<2x32xbf16>
      %c0_92 = arith.constant 0 : index
      %c0_93 = arith.constant 0 : index
      %174 = vector.load %arg21[%c0_92, %c0_93] : memref<32x128xbf16, #tpu.memory_space<vmem>>, vector<32x128xbf16>
      %cst_94 = arith.constant dense<0.000000e+00> : vector<2x128xf32>
      %175 = tpu.matmul %173, %174, %cst_94 {dimension_numbers = #tpu.dot_dimension_numbers<[1], [0], [0], [1], [0, 0, 1, 1], [], []>} : vector<2x32xbf16>, vector<32x128xbf16>, vector<2x128xf32> -> vector<2x128xf32>
      %c0_95 = arith.constant 0 : index
      %c0_96 = arith.constant 0 : index
      %176 = vector.load %arg22[%c0_95, %c0_96] : memref<1x128xf32, #tpu.memory_space<vmem>>, vector<1x128xf32>
      %177 = vector.broadcast %176 : vector<1x128xf32> to vector<2x128xf32>
      %178 = arith.addf %175, %177 : vector<2x128xf32>
      %c0_97 = arith.constant 0 : index
      %c0_98 = arith.constant 0 : index
      %179 = vector.load %arg23[%c0_97, %c0_98] : memref<2x128xf32, #tpu.memory_space<vmem>>, vector<2x128xf32>
      tpu.vector_store %arg23[%c0_97, %c0_98], %178 {strides = array<i32>} : memref<2x128xf32, #tpu.memory_space<vmem>>, vector<2x128xf32>,
    } else {
    }
    return
  }
  func.func @transform_0(%arg0: i32) -> (i32, i32) {
    %c0_i32 = arith.constant 0 : i32
    %c0_i32_0 = arith.constant 0 : i32
    %c0_i32_1 = arith.constant 0 : i32
    return %c0_i32, %c0_i32_0 : i32, i32
  }
  func.func @transform_1(%arg0: i32) -> (i32, i32, i32) {
    %c0_i32 = arith.constant 0 : i32
    %c0_i32_0 = arith.constant 0 : i32
    %c0_i32_1 = arith.constant 0 : i32
    %c0_i32_2 = arith.constant 0 : i32
    return %c0_i32, %c0_i32_0, %c0_i32_1 : i32, i32, i32
  }
  func.func @transform_2(%arg0: i32) -> (i32, i32) {
    %c0_i32 = arith.constant 0 : i32
    %c0_i32_0 = arith.constant 0 : i32
    %c0_i32_1 = arith.constant 0 : i32
    return %c0_i32, %c0_i32_0 : i32, i32
  }
  func.func @transform_3(%arg0: i32) -> (i32, i32) {
    %c0_i32 = arith.constant 0 : i32
    %c0_i32_0 = arith.constant 0 : i32
    %c0_i32_1 = arith.constant 0 : i32
    return %c0_i32, %c0_i32_0 : i32, i32
  }
  func.func @transform_4(%arg0: i32) -> (i32, i32, i32) {
    %c0_i32 = arith.constant 0 : i32
    %c0_i32_0 = arith.constant 0 : i32
    %c0_i32_1 = arith.constant 0 : i32
    return %arg0, %c0_i32, %c0_i32_0 : i32, i32, i32
  }
  func.func @transform_5(%arg0: i32) -> (i32, i32, i32) {
    %c0_i32 = arith.constant 0 : i32
    %c0_i32_0 = arith.constant 0 : i32
    %c0_i32_1 = arith.constant 0 : i32
    return %arg0, %c0_i32, %c0_i32_0 : i32, i32, i32
  }
  func.func @transform_6(%arg0: i32) -> (i32, i32, i32) {
    %c0_i32 = arith.constant 0 : i32
    %c0_i32_0 = arith.constant 0 : i32
    %c0_i32_1 = arith.constant 0 : i32
    return %arg0, %c0_i32, %c0_i32_0 : i32, i32, i32
  }
  func.func @transform_7(%arg0: i32) -> (i32, i32, i32) {
    %c0_i32 = arith.constant 0 : i32
    %c0_i32_0 = arith.constant 0 : i32
    %c0_i32_1 = arith.constant 0 : i32
    return %arg0, %c0_i32, %c0_i32_0 : i32, i32, i32
  }
  func.func @transform_8(%arg0: i32) -> (i32, i32, i32) {
    %c0_i32 = arith.constant 0 : i32
    %c0_i32_0 = arith.constant 0 : i32
    %c0_i32_1 = arith.constant 0 : i32
    return %arg0, %c0_i32, %c0_i32_0 : i32, i32, i32
  }
  func.func @transform_9(%arg0: i32) -> (i32, i32, i32) {
    %c0_i32 = arith.constant 0 : i32
    %c0_i32_0 = arith.constant 0 : i32
    %c0_i32_1 = arith.constant 0 : i32
    return %arg0, %c0_i32, %c0_i32_0 : i32, i32, i32
  }
  func.func @transform_10(%arg0: i32) -> (i32, i32, i32) {
    %c0_i32 = arith.constant 0 : i32
    %c0_i32_0 = arith.constant 0 : i32
    %c0_i32_1 = arith.constant 0 : i32
    return %arg0, %c0_i32, %c0_i32_0 : i32, i32, i32
  }
  func.func @transform_11(%arg0: i32) -> (i32, i32, i32) {
    %c0_i32 = arith.constant 0 : i32
    %c0_i32_0 = arith.constant 0 : i32
    %c0_i32_1 = arith.constant 0 : i32
    return %arg0, %c0_i32, %c0_i32_0 : i32, i32, i32
  }
  func.func @transform_12(%arg0: i32) -> (i32, i32, i32) {
    %c0_i32 = arith.constant 0 : i32
    %c0_i32_0 = arith.constant 0 : i32
    %c0_i32_1 = arith.constant 0 : i32
    return %arg0, %c0_i32, %c0_i32_0 : i32, i32, i32
  }
  func.func @transform_13(%arg0: i32) -> (i32, i32, i32) {
    %c0_i32 = arith.constant 0 : i32
    %c0_i32_0 = arith.constant 0 : i32
    %c0_i32_1 = arith.constant 0 : i32
    return %arg0, %c0_i32, %c0_i32_0 : i32, i32, i32
  }
  func.func @transform_14(%arg0: i32) -> (i32, i32, i32) {
    %c0_i32 = arith.constant 0 : i32
    %c0_i32_0 = arith.constant 0 : i32
    %c0_i32_1 = arith.constant 0 : i32
    return %arg0, %c0_i32, %c0_i32_0 : i32, i32, i32
  }
  func.func @transform_15(%arg0: i32) -> (i32, i32, i32) {
    %c0_i32 = arith.constant 0 : i32
    %c0_i32_0 = arith.constant 0 : i32
    %c0_i32_1 = arith.constant 0 : i32
    return %arg0, %c0_i32, %c0_i32_0 : i32, i32, i32
  }
  func.func @transform_16(%arg0: i32) -> (i32, i32, i32) {
    %c0_i32 = arith.constant 0 : i32
    %c0_i32_0 = arith.constant 0 : i32
    %c0_i32_1 = arith.constant 0 : i32
    return %arg0, %c0_i32, %c0_i32_0 : i32, i32, i32
  }
  func.func @transform_17(%arg0: i32) -> (i32, i32, i32) {
    %c0_i32 = arith.constant 0 : i32
    %c0_i32_0 = arith.constant 0 : i32
    %c0_i32_1 = arith.constant 0 : i32
    return %arg0, %c0_i32, %c0_i32_0 : i32, i32, i32
  }
  func.func @transform_18(%arg0: i32) -> (i32, i32, i32) {
    %c0_i32 = arith.constant 0 : i32
    %c0_i32_0 = arith.constant 0 : i32
    %c0_i32_1 = arith.constant 0 : i32
    return %arg0, %c0_i32, %c0_i32_0 : i32, i32, i32
  }
  func.func @transform_19(%arg0: i32) -> (i32, i32, i32) {
    %c0_i32 = arith.constant 0 : i32
    %c0_i32_0 = arith.constant 0 : i32
    %c0_i32_1 = arith.constant 0 : i32
    return %arg0, %c0_i32, %c0_i32_0 : i32, i32, i32
  }
  func.func @transform_20(%arg0: i32) -> (i32, i32) {
    %c0_i32 = arith.constant 0 : i32
    %c0_i32_0 = arith.constant 0 : i32
    %c0_i32_1 = arith.constant 0 : i32
    return %c0_i32, %c0_i32_0 : i32, i32
  }
  func.func @transform_21(%arg0: i32) -> (i32, i32) {
    %c0_i32 = arith.constant 0 : i32
    %c0_i32_0 = arith.constant 0 : i32
    %c0_i32_1 = arith.constant 0 : i32
    return %c0_i32, %c0_i32_0 : i32, i32
  }
  func.func @transform_22(%arg0: i32) -> (i32, i32) {
    %c0_i32 = arith.constant 0 : i32
    %c0_i32_0 = arith.constant 0 : i32
    %c0_i32_1 = arith.constant 0 : i32
    return %c0_i32, %c0_i32_0 : i32, i32
  }
}

</mosaic_0001>

<llo_original>
// kernel: tpu_custom_call.1
$region0: #{tpu_custom_call.1}
  #allocation0 [shape = 'u32[]', space=smem, size = 0x4, offset = 0x4, fixed_abs, tag = 'smem constant byte address 0x4 - core index']
  #allocation1 [shape = 'u32[144,128]{1,0:T(1,128)}', space=vmem, size = 0x12000, scoped, tag = 'internal scratch']
  #allocation2 [shape = 'f32[16,32]{1,0:T(8,128)}', space=vmem, size = 0x2000, scoped, tag = 'scratch operand']
  #allocation3 [shape = 'f32[16,32]{1,0:T(8,128)}', space=vmem, size = 0x2000, scoped, tag = 'scratch operand']
  %s0 = inlined_call_operand.hbm [shape: f32[16,32], index: 0, kind: input, shape index: {}]
  %s1 = inlined_call_operand.vmem [shape: f32[2,1,8], index: 1, kind: input, shape index: {}]
  %s2 = inlined_call_operand.hbm [shape: f32[1,32], index: 2, kind: input, shape index: {}]
  %s3 = inlined_call_operand.hbm [shape: f32[1,32], index: 3, kind: input, shape index: {}]
  %s4 = inlined_call_operand.vmem [shape: bf16[2,32,32], index: 4, kind: input, shape index: {}]
  %s5 = inlined_call_operand.hbm [shape: f32[2,1,32], index: 5, kind: input, shape index: {}]
  %s6 = inlined_call_operand.vmem [shape: bf16[2,32,32], index: 6, kind: input, shape index: {}]
  %s7 = inlined_call_operand.vmem [shape: f32[2,1,32], index: 7, kind: input, shape index: {}]
  %s8 = inlined_call_operand.vmem [shape: bf16[2,32,32], index: 8, kind: input, shape index: {}]
  %s9 = inlined_call_operand.vmem [shape: f32[2,1,32], index: 9, kind: input, shape index: {}]
  %s10 = inlined_call_operand.hbm [shape: bf16[2,32,32], index: 10, kind: input, shape index: {}]
  %s11 = inlined_call_operand.vmem [shape: f32[2,1,32], index: 11, kind: input, shape index: {}]
  %s12 = inlined_call_operand.vmem [shape: f32[2,1,32], index: 12, kind: input, shape index: {}]
  %s13 = inlined_call_operand.vmem [shape: f32[2,1,32], index: 13, kind: input, shape index: {}]
  %s14 = inlined_call_operand.hbm [shape: bf16[2,32,64], index: 14, kind: input, shape index: {}]
  %s15 = inlined_call_operand.hbm [shape: f32[2,1,64], index: 15, kind: input, shape index: {}]
  %s16 = inlined_call_operand.vmem [shape: bf16[2,64,32], index: 16, kind: input, shape index: {}]
  %s17 = inlined_call_operand.vmem [shape: f32[2,1,32], index: 17, kind: input, shape index: {}]
  %s18 = inlined_call_operand.vmem [shape: f32[2,1,32], index: 18, kind: input, shape index: {}]
  %s19 = inlined_call_operand.vmem [shape: f32[2,1,32], index: 19, kind: input, shape index: {}]
  %s20 = inlined_call_operand.vmem [shape: bf16[32,128], index: 20, kind: input, shape index: {}]
  %s21 = inlined_call_operand.vmem [shape: f32[1,128], index: 21, kind: input, shape index: {}]
  %s22 = inlined_call_operand.hbm [shape: f32[2,128], index: 22, kind: output, shape index: {}]
  %s23 = sld [smem:[#allocation0]]
  $region157: #{tpu_custom_call.1} parent=0
    _
  %s25 = ssub.s32 1, %s23
  %s26 = scalar_select 0, %s25, %s23
  $region1: #{tpu_custom_call.1} parent=0
    #allocation4 [shape = 'u8[8192]{0}', space=vmem, size = 0x2000, scoped, tag = 'input window, operand 0, single buffered']
    #allocation5 [shape = 's32[2]{0}', space=sflag, size = 0x8, scoped, tag = 'scoped memory for tpu_custom_call.1']
    #allocation6 [shape = 's32[2]{0}', space=sflag, size = 0x8, scoped, tag = 'scoped memory for tpu_custom_call.1']
    #allocation7 [shape = 'u8[512]{0}', space=vmem, size = 0x400, scoped, tag = 'input window, operand 2, single buffered']
    #allocation8 [shape = 's32[1]{0}', space=sflag, size = 0x4, scoped, tag = 'scoped memory for tpu_custom_call.1']
    #allocation9 [shape = 'u8[512]{0}', space=vmem, size = 0x400, scoped, tag = 'input window, operand 3, single buffered']
    #allocation10 [shape = 'u8[1024]{0}', space=vmem, size = 0x400, scoped, tag = 'input window, operand 5']
    #allocation11 [shape = 's32[2]{0}', space=sflag, size = 0x8, scoped, tag = 'scoped memory for tpu_custom_call.1']
    #allocation12 [shape = 'u8[16384]{0}', space=vmem, size = 0x4000, scoped, tag = 'input window, operand 10']
    #allocation13 [shape = 'u8[16384]{0}', space=vmem, size = 0x4000, scoped, tag = 'input window, operand 14']
    #allocation14 [shape = 's32[2]{0}', space=sflag, size = 0x8, scoped, tag = 'scoped memory for tpu_custom_call.1']
    #allocation15 [shape = 'u8[1024]{0}', space=vmem, size = 0x400, scoped, tag = 'input window, operand 15']
    #allocation16 [shape = 'u8[1024]{0}', space=vmem, size = 0x400, scoped, tag = 'output window, operand 0, single buffered']
    %27 = vsyncpa [#allocation5], 0
    %28 = vsyncpa [#allocation8], 0
    %29 = vsyncpa [#allocation11], 0
    %s30 = scalar_lea.sflag [#allocation11], 1
    %31 = vsyncpa %s30, 0
    %32 = vsyncpa [#allocation14], 0
    %s33 = scalar_lea.sflag [#allocation14], 1
    %34 = vsyncpa %s33, 0
    %35 = vsyncpa [#allocation6], 0
    loop: start=0, step=1, limit=4
    $region2: #{tpu_custom_call.1} parent=1 // loop_pre_header
      _
    $region3: #{tpu_custom_call.1} parent=1 // loop_header
      %s37 = sphi 0, %s41
      %p38 = scmp.ge.s32.totalorder %s37, 4
      %s45 = sphi 0, %s45
      %s47 = sphi 0, %s45
      %s48 = sphi 0, %s47
      %s62 = sphi 0, %s48
      %s66 = sphi 0, %s66
      %s68 = sphi 0, %s66
      %s69 = sphi 0, %s68
      %s83 = sphi 0, %s69
      %s87 = sphi 0, %s87
      %s89 = sphi 0, %s87
      %s90 = sphi 0, %s89
      %s104 = sphi 0, %s90
      %s108 = sphi 0, %s108
      %s110 = sphi 0, %s108
      %s111 = sphi 0, %s110
      %s125 = sphi 0, %s111
      %s131 = sphi 0, %s133
      %s134 = sphi 0, %s131
      %s135 = sphi 0, %s134
      %s151 = sphi 0, %s135
      %s157 = sphi 0, %s159
      %s160 = sphi 0, %s157
      %s161 = sphi 0, %s160
      %s177 = sphi 0, %s161
      %s183 = sphi 0, %s185
      %s186 = sphi 0, %s183
      %s187 = sphi 0, %s186
      %s203 = sphi 0, %s187
      %s209 = sphi 0, %s211
      %s212 = sphi 0, %s209
      %s213 = sphi 0, %s212
      %s229 = sphi 0, %s213
      %s235 = sphi 0, %s237
      %s238 = sphi 0, %s235
      %s239 = sphi 0, %s238
      %s255 = sphi 0, %s239
      %s261 = sphi 0, %s263
      %s264 = sphi 0, %s261
      %s265 = sphi 0, %s264
      %s281 = sphi 0, %s265
      %s287 = sphi 0, %s289
      %s290 = sphi 0, %s287
      %s291 = sphi 0, %s290
      %s307 = sphi 0, %s291
      %s313 = sphi 0, %s315
      %s316 = sphi 0, %s313
      %s317 = sphi 0, %s316
      %s333 = sphi 0, %s317
      %s339 = sphi 0, %s341
      %s342 = sphi 0, %s339
      %s343 = sphi 0, %s342
      %s359 = sphi 0, %s343
      %s365 = sphi 0, %s367
      %s368 = sphi 0, %s365
      %s369 = sphi 0, %s368
      %s385 = sphi 0, %s369
      %s391 = sphi 0, %s393
      %s394 = sphi 0, %s391
      %s395 = sphi 0, %s394
      %s411 = sphi 0, %s395
      %s417 = sphi 0, %s419
      %s420 = sphi 0, %s417
      %s421 = sphi 0, %s420
      %s437 = sphi 0, %s421
      %s443 = sphi 0, %s445
      %s446 = sphi 0, %s443
      %s447 = sphi 0, %s446
      %s463 = sphi 0, %s447
      %s469 = sphi 0, %s471
      %s472 = sphi 0, %s469
      %s473 = sphi 0, %s472
      %s489 = sphi 0, %s473
      %s495 = sphi 0, %s497
      %s498 = sphi 0, %s495
      %s499 = sphi 0, %s498
      %s515 = sphi 0, %s499
      %s521 = sphi 0, %s523
      %s524 = sphi 0, %s521
      %s525 = sphi 0, %s524
      %s541 = sphi 0, %s525
      %s545 = sphi 0, %s545
      %s547 = sphi 0, %s545
      %s548 = sphi 0, %s547
      %s562 = sphi 0, %s548
      %s566 = sphi 0, %s566
      %s568 = sphi 0, %s566
      %s569 = sphi 0, %s568
      %s583 = sphi 0, %s569
      %s587 = sphi 0, %s587
      %s589 = sphi 0, %s587
      %s590 = sphi 0, %s589
      %s604 = sphi 0, %s590
    $region4: #{tpu_custom_call.1} parent=1 // loop_header_branch
      %40 = sbr.rel (%p38) target = $region8
    $region5: #{tpu_custom_call.1} parent=1 // loop_body
      %s42 = ssub.s32 %s37, 1
      %s43 = ssub.s32 %s37, 2
      %s44 = sadd.s32 %s37, 1
      %s46 = sadd.s32 %s45, 1
      %p49 = scmp.eq.s32.totalorder %s37, 1
      %p50 = scmp.ne.s32.totalorder %s45, %s47
      %p51 = scmp.eq.s32.totalorder %s37, 0
      %p52 = por %p50, %p51
      %p53 = scmp.ne.s32.totalorder %s45, %s47
      %p54 = scmp.eq.s32.totalorder %s42, 1
      %p55 = por %p53, %p54
      %p56 = scmp.ne.s32.totalorder %s47, %s48
      %p57 = scmp.eq.s32.totalorder %s42, 0
      %p58 = por %p56, %p57
      %p59 = scmp.ne.s32.totalorder %s47, %s48
      %p60 = scmp.eq.s32.totalorder %s43, 1
      %p61 = por %p59, %p60
      %p63 = scmp.ne.s32.totalorder %s48, %s62
      %p64 = scmp.eq.s32.totalorder %s43, 0
      %p65 = por %p63, %p64
      %s67 = sadd.s32 %s66, 1
      %p70 = scmp.eq.s32.totalorder %s37, 1
      %p71 = scmp.ne.s32.totalorder %s66, %s68
      %p72 = scmp.eq.s32.totalorder %s37, 0
      %p73 = por %p71, %p72
      %p74 = scmp.ne.s32.totalorder %s66, %s68
      %p75 = scmp.eq.s32.totalorder %s42, 1
      %p76 = por %p74, %p75
      %p77 = scmp.ne.s32.totalorder %s68, %s69
      %p78 = scmp.eq.s32.totalorder %s42, 0
      %p79 = por %p77, %p78
      %p80 = scmp.ne.s32.totalorder %s68, %s69
      %p81 = scmp.eq.s32.totalorder %s43, 1
      %p82 = por %p80, %p81
      %p84 = scmp.ne.s32.totalorder %s69, %s83
      %p85 = scmp.eq.s32.totalorder %s43, 0
      %p86 = por %p84, %p85
      %s88 = sadd.s32 %s87, 1
      %p91 = scmp.eq.s32.totalorder %s37, 1
      %p92 = scmp.ne.s32.totalorder %s87, %s89
      %p93 = scmp.eq.s32.totalorder %s37, 0
      %p94 = por %p92, %p93
      %p95 = scmp.ne.s32.totalorder %s87, %s89
      %p96 = scmp.eq.s32.totalorder %s42, 1
      %p97 = por %p95, %p96
      %p98 = scmp.ne.s32.totalorder %s89, %s90
      %p99 = scmp.eq.s32.totalorder %s42, 0
      %p100 = por %p98, %p99
      %p101 = scmp.ne.s32.totalorder %s89, %s90
      %p102 = scmp.eq.s32.totalorder %s43, 1
      %p103 = por %p101, %p102
      %p105 = scmp.ne.s32.totalorder %s90, %s104
      %p106 = scmp.eq.s32.totalorder %s43, 0
      %p107 = por %p105, %p106
      %s109 = sadd.s32 %s108, 1
      %p112 = scmp.eq.s32.totalorder %s37, 1
      %p113 = scmp.ne.s32.totalorder %s108, %s110
      %p114 = scmp.eq.s32.totalorder %s37, 0
      %p115 = por %p113, %p114
      %p116 = scmp.ne.s32.totalorder %s108, %s110
      %p117 = scmp.eq.s32.totalorder %s42, 1
      %p118 = por %p116, %p117
      %p119 = scmp.ne.s32.totalorder %s110, %s111
      %p120 = scmp.eq.s32.totalorder %s42, 0
      %p121 = por %p119, %p120
      %p122 = scmp.ne.s32.totalorder %s110, %s111
      %p123 = scmp.eq.s32.totalorder %s43, 1
      %p124 = por %p122, %p123
      %p126 = scmp.ne.s32.totalorder %s111, %s125
      %p127 = scmp.eq.s32.totalorder %s43, 0
      %p128 = por %p126, %p127
      %s129 = ssub.s32 %s37, %s44
      %p130 = scmp.eq.s32.totalorder %s129, 0
      %s132 = sadd.s32 %s131, 1
      %s133 = scalar_select %p130, %s131, %s132
      %p136 = pneg %p130
      %p137 = scmp.eq.s32.totalorder %s37, 1
      %p138 = por %p136, %p137
      %p139 = scmp.ne.s32.totalorder %s131, %s134
      %p140 = scmp.eq.s32.totalorder %s37, 0
      %p141 = por %p139, %p140
      %p142 = scmp.ne.s32.totalorder %s131, %s134
      %p143 = scmp.eq.s32.totalorder %s42, 1
      %p144 = por %p142, %p143
      %p145 = scmp.ne.s32.totalorder %s134, %s135
      %p146 = scmp.eq.s32.totalorder %s42, 0
      %p147 = por %p145, %p146
      %p148 = scmp.ne.s32.totalorder %s134, %s135
      %p149 = scmp.eq.s32.totalorder %s43, 1
      %p150 = por %p148, %p149
      %p152 = scmp.ne.s32.totalorder %s135, %s151
      %p153 = scmp.eq.s32.totalorder %s43, 0
      %p154 = por %p152, %p153
      %s155 = ssub.s32 %s37, %s44
      %p156 = scmp.eq.s32.totalorder %s155, 0
      %s158 = sadd.s32 %s157, 1
      %s159 = scalar_select %p156, %s157, %s158
      %p162 = pneg %p156
      %p163 = scmp.eq.s32.totalorder %s37, 1
      %p164 = por %p162, %p163
      %p165 = scmp.ne.s32.totalorder %s157, %s160
      %p166 = scmp.eq.s32.totalorder %s37, 0
      %p167 = por %p165, %p166
      %p168 = scmp.ne.s32.totalorder %s157, %s160
      %p169 = scmp.eq.s32.totalorder %s42, 1
      %p170 = por %p168, %p169
      %p171 = scmp.ne.s32.totalorder %s160, %s161
      %p172 = scmp.eq.s32.totalorder %s42, 0
      %p173 = por %p171, %p172
      %p174 = scmp.ne.s32.totalorder %s160, %s161
      %p175 = scmp.eq.s32.totalorder %s43, 1
      %p176 = por %p174, %p175
      %p178 = scmp.ne.s32.totalorder %s161, %s177
      %p179 = scmp.eq.s32.totalorder %s43, 0
      %p180 = por %p178, %p179
      %s181 = ssub.s32 %s37, %s44
      %p182 = scmp.eq.s32.totalorder %s181, 0
      %s184 = sadd.s32 %s183, 1
      %s185 = scalar_select %p182, %s183, %s184
      %p188 = pneg %p182
      %p189 = scmp.eq.s32.totalorder %s37, 1
      %p190 = por %p188, %p189
      %p191 = scmp.ne.s32.totalorder %s183, %s186
      %p192 = scmp.eq.s32.totalorder %s37, 0
      %p193 = por %p191, %p192
      %p194 = scmp.ne.s32.totalorder %s183, %s186
      %p195 = scmp.eq.s32.totalorder %s42, 1
      %p196 = por %p194, %p195
      %p197 = scmp.ne.s32.totalorder %s186, %s187
      %p198 = scmp.eq.s32.totalorder %s42, 0
      %p199 = por %p197, %p198
      %p200 = scmp.ne.s32.totalorder %s186, %s187
      %p201 = scmp.eq.s32.totalorder %s43, 1
      %p202 = por %p200, %p201
      %p204 = scmp.ne.s32.totalorder %s187, %s203
      %p205 = scmp.eq.s32.totalorder %s43, 0
      %p206 = por %p204, %p205
      %s207 = ssub.s32 %s37, %s44
      %p208 = scmp.eq.s32.totalorder %s207, 0
      %s210 = sadd.s32 %s209, 1
      %s211 = scalar_select %p208, %s209, %s210
      %p214 = pneg %p208
      %p215 = scmp.eq.s32.totalorder %s37, 1
      %p216 = por %p214, %p215
      %p217 = scmp.ne.s32.totalorder %s209, %s212
      %p218 = scmp.eq.s32.totalorder %s37, 0
      %p219 = por %p217, %p218
      %p220 = scmp.ne.s32.totalorder %s209, %s212
      %p221 = scmp.eq.s32.totalorder %s42, 1
      %p222 = por %p220, %p221
      %p223 = scmp.ne.s32.totalorder %s212, %s213
      %p224 = scmp.eq.s32.totalorder %s42, 0
      %p225 = por %p223, %p224
      %p226 = scmp.ne.s32.totalorder %s212, %s213
      %p227 = scmp.eq.s32.totalorder %s43, 1
      %p228 = por %p226, %p227
      %p230 = scmp.ne.s32.totalorder %s213, %s229
      %p231 = scmp.eq.s32.totalorder %s43, 0
      %p232 = por %p230, %p231
      %s233 = ssub.s32 %s37, %s44
      %p234 = scmp.eq.s32.totalorder %s233, 0
      %s236 = sadd.s32 %s235, 1
      %s237 = scalar_select %p234, %s235, %s236
      %p240 = pneg %p234
      %p241 = scmp.eq.s32.totalorder %s37, 1
      %p242 = por %p240, %p241
      %p243 = scmp.ne.s32.totalorder %s235, %s238
      %p244 = scmp.eq.s32.totalorder %s37, 0
      %p245 = por %p243, %p244
      %p246 = scmp.ne.s32.totalorder %s235, %s238
      %p247 = scmp.eq.s32.totalorder %s42, 1
      %p248 = por %p246, %p247
      %p249 = scmp.ne.s32.totalorder %s238, %s239
      %p250 = scmp.eq.s32.totalorder %s42, 0
      %p251 = por %p249, %p250
      %p252 = scmp.ne.s32.totalorder %s238, %s239
      %p253 = scmp.eq.s32.totalorder %s43, 1
      %p254 = por %p252, %p253
      %p256 = scmp.ne.s32.totalorder %s239, %s255
      %p257 = scmp.eq.s32.totalorder %s43, 0
      %p258 = por %p256, %p257
      %s259 = ssub.s32 %s37, %s44
      %p260 = scmp.eq.s32.totalorder %s259, 0
      %s262 = sadd.s32 %s261, 1
      %s263 = scalar_select %p260, %s261, %s262
      %p266 = pneg %p260
      %p267 = scmp.eq.s32.totalorder %s37, 1
      %p268 = por %p266, %p267
      %p269 = scmp.ne.s32.totalorder %s261, %s264
      %p270 = scmp.eq.s32.totalorder %s37, 0
      %p271 = por %p269, %p270
      %p272 = scmp.ne.s32.totalorder %s261, %s264
      %p273 = scmp.eq.s32.totalorder %s42, 1
      %p274 = por %p272, %p273
      %p275 = scmp.ne.s32.totalorder %s264, %s265
      %p276 = scmp.eq.s32.totalorder %s42, 0
      %p277 = por %p275, %p276
      %p278 = scmp.ne.s32.totalorder %s264, %s265
      %p279 = scmp.eq.s32.totalorder %s43, 1
      %p280 = por %p278, %p279
      %p282 = scmp.ne.s32.totalorder %s265, %s281
      %p283 = scmp.eq.s32.totalorder %s43, 0
      %p284 = por %p282, %p283
      %s285 = ssub.s32 %s37, %s44
      %p286 = scmp.eq.s32.totalorder %s285, 0
      %s288 = sadd.s32 %s287, 1
      %s289 = scalar_select %p286, %s287, %s288
      %p292 = pneg %p286
      %p293 = scmp.eq.s32.totalorder %s37, 1
      %p294 = por %p292, %p293
      %p295 = scmp.ne.s32.totalorder %s287, %s290
      %p296 = scmp.eq.s32.totalorder %s37, 0
      %p297 = por %p295, %p296
      %p298 = scmp.ne.s32.totalorder %s287, %s290
      %p299 = scmp.eq.s32.totalorder %s42, 1
      %p300 = por %p298, %p299
      %p301 = scmp.ne.s32.totalorder %s290, %s291
      %p302 = scmp.eq.s32.totalorder %s42, 0
      %p303 = por %p301, %p302
      %p304 = scmp.ne.s32.totalorder %s290, %s291
      %p305 = scmp.eq.s32.totalorder %s43, 1
      %p306 = por %p304, %p305
      %p308 = scmp.ne.s32.totalorder %s291, %s307
      %p309 = scmp.eq.s32.totalorder %s43, 0
      %p310 = por %p308, %p309
      %s311 = ssub.s32 %s37, %s44
      %p312 = scmp.eq.s32.totalorder %s311, 0
      %s314 = sadd.s32 %s313, 1
      %s315 = scalar_select %p312, %s313, %s314
      %p318 = pneg %p312
      %p319 = scmp.eq.s32.totalorder %s37, 1
      %p320 = por %p318, %p319
      %p321 = scmp.ne.s32.totalorder %s313, %s316
      %p322 = scmp.eq.s32.totalorder %s37, 0
      %p323 = por %p321, %p322
      %p324 = scmp.ne.s32.totalorder %s313, %s316
      %p325 = scmp.eq.s32.totalorder %s42, 1
      %p326 = por %p324, %p325
      %p327 = scmp.ne.s32.totalorder %s316, %s317
      %p328 = scmp.eq.s32.totalorder %s42, 0
      %p329 = por %p327, %p328
      %p330 = scmp.ne.s32.totalorder %s316, %s317
      %p331 = scmp.eq.s32.totalorder %s43, 1
      %p332 = por %p330, %p331
      %p334 = scmp.ne.s32.totalorder %s317, %s333
      %p335 = scmp.eq.s32.totalorder %s43, 0
      %p336 = por %p334, %p335
      %s337 = ssub.s32 %s37, %s44
      %p338 = scmp.eq.s32.totalorder %s337, 0
      %s340 = sadd.s32 %s339, 1
      %s341 = scalar_select %p338, %s339, %s340
      %p344 = pneg %p338
      %p345 = scmp.eq.s32.totalorder %s37, 1
      %p346 = por %p344, %p345
      %p347 = scmp.ne.s32.totalorder %s339, %s342
      %p348 = scmp.eq.s32.totalorder %s37, 0
      %p349 = por %p347, %p348
      %p350 = scmp.ne.s32.totalorder %s339, %s342
      %p351 = scmp.eq.s32.totalorder %s42, 1
      %p352 = por %p350, %p351
      %p353 = scmp.ne.s32.totalorder %s342, %s343
      %p354 = scmp.eq.s32.totalorder %s42, 0
      %p355 = por %p353, %p354
      %p356 = scmp.ne.s32.totalorder %s342, %s343
      %p357 = scmp.eq.s32.totalorder %s43, 1
      %p358 = por %p356, %p357
      %p360 = scmp.ne.s32.totalorder %s343, %s359
      %p361 = scmp.eq.s32.totalorder %s43, 0
      %p362 = por %p360, %p361
      %s363 = ssub.s32 %s37, %s44
      %p364 = scmp.eq.s32.totalorder %s363, 0
      %s366 = sadd.s32 %s365, 1
      %s367 = scalar_select %p364, %s365, %s366
      %p370 = pneg %p364
      %p371 = scmp.eq.s32.totalorder %s37, 1
      %p372 = por %p370, %p371
      %p373 = scmp.ne.s32.totalorder %s365, %s368
      %p374 = scmp.eq.s32.totalorder %s37, 0
      %p375 = por %p373, %p374
      %p376 = scmp.ne.s32.totalorder %s365, %s368
      %p377 = scmp.eq.s32.totalorder %s42, 1
      %p378 = por %p376, %p377
      %p379 = scmp.ne.s32.totalorder %s368, %s369
      %p380 = scmp.eq.s32.totalorder %s42, 0
      %p381 = por %p379, %p380
      %p382 = scmp.ne.s32.totalorder %s368, %s369
      %p383 = scmp.eq.s32.totalorder %s43, 1
      %p384 = por %p382, %p383
      %p386 = scmp.ne.s32.totalorder %s369, %s385
      %p387 = scmp.eq.s32.totalorder %s43, 0
      %p388 = por %p386, %p387
      %s389 = ssub.s32 %s37, %s44
      %p390 = scmp.eq.s32.totalorder %s389, 0
      %s392 = sadd.s32 %s391, 1
      %s393 = scalar_select %p390, %s391, %s392
      %p396 = pneg %p390
      %p397 = scmp.eq.s32.totalorder %s37, 1
      %p398 = por %p396, %p397
      %p399 = scmp.ne.s32.totalorder %s391, %s394
      %p400 = scmp.eq.s32.totalorder %s37, 0
      %p401 = por %p399, %p400
      %p402 = scmp.ne.s32.totalorder %s391, %s394
      %p403 = scmp.eq.s32.totalorder %s42, 1
      %p404 = por %p402, %p403
      %p405 = scmp.ne.s32.totalorder %s394, %s395
      %p406 = scmp.eq.s32.totalorder %s42, 0
      %p407 = por %p405, %p406
      %p408 = scmp.ne.s32.totalorder %s394, %s395
      %p409 = scmp.eq.s32.totalorder %s43, 1
      %p410 = por %p408, %p409
      %p412 = scmp.ne.s32.totalorder %s395, %s411
      %p413 = scmp.eq.s32.totalorder %s43, 0
      %p414 = por %p412, %p413
      %s415 = ssub.s32 %s37, %s44
      %p416 = scmp.eq.s32.totalorder %s415, 0
      %s418 = sadd.s32 %s417, 1
      %s419 = scalar_select %p416, %s417, %s418
      %p422 = pneg %p416
      %p423 = scmp.eq.s32.totalorder %s37, 1
      %p424 = por %p422, %p423
      %p425 = scmp.ne.s32.totalorder %s417, %s420
      %p426 = scmp.eq.s32.totalorder %s37, 0
      %p427 = por %p425, %p426
      %p428 = scmp.ne.s32.totalorder %s417, %s420
      %p429 = scmp.eq.s32.totalorder %s42, 1
      %p430 = por %p428, %p429
      %p431 = scmp.ne.s32.totalorder %s420, %s421
      %p432 = scmp.eq.s32.totalorder %s42, 0
      %p433 = por %p431, %p432
      %p434 = scmp.ne.s32.totalorder %s420, %s421
      %p435 = scmp.eq.s32.totalorder %s43, 1
      %p436 = por %p434, %p435
      %p438 = scmp.ne.s32.totalorder %s421, %s437
      %p439 = scmp.eq.s32.totalorder %s43, 0
      %p440 = por %p438, %p439
      %s441 = ssub.s32 %s37, %s44
      %p442 = scmp.eq.s32.totalorder %s441, 0
      %s444 = sadd.s32 %s443, 1
      %s445 = scalar_select %p442, %s443, %s444
      %p448 = pneg %p442
      %p449 = scmp.eq.s32.totalorder %s37, 1
      %p450 = por %p448, %p449
      %p451 = scmp.ne.s32.totalorder %s443, %s446
      %p452 = scmp.eq.s32.totalorder %s37, 0
      %p453 = por %p451, %p452
      %p454 = scmp.ne.s32.totalorder %s443, %s446
      %p455 = scmp.eq.s32.totalorder %s42, 1
      %p456 = por %p454, %p455
      %p457 = scmp.ne.s32.totalorder %s446, %s447
      %p458 = scmp.eq.s32.totalorder %s42, 0
      %p459 = por %p457, %p458
      %p460 = scmp.ne.s32.totalorder %s446, %s447
      %p461 = scmp.eq.s32.totalorder %s43, 1
      %p462 = por %p460, %p461
      %p464 = scmp.ne.s32.totalorder %s447, %s463
      %p465 = scmp.eq.s32.totalorder %s43, 0
      %p466 = por %p464, %p465
      %s467 = ssub.s32 %s37, %s44
      %p468 = scmp.eq.s32.totalorder %s467, 0
      %s470 = sadd.s32 %s469, 1
      %s471 = scalar_select %p468, %s469, %s470
      %p474 = pneg %p468
      %p475 = scmp.eq.s32.totalorder %s37, 1
      %p476 = por %p474, %p475
      %p477 = scmp.ne.s32.totalorder %s469, %s472
      %p478 = scmp.eq.s32.totalorder %s37, 0
      %p479 = por %p477, %p478
      %p480 = scmp.ne.s32.totalorder %s469, %s472
      %p481 = scmp.eq.s32.totalorder %s42, 1
      %p482 = por %p480, %p481
      %p483 = scmp.ne.s32.totalorder %s472, %s473
      %p484 = scmp.eq.s32.totalorder %s42, 0
      %p485 = por %p483, %p484
      %p486 = scmp.ne.s32.totalorder %s472, %s473
      %p487 = scmp.eq.s32.totalorder %s43, 1
      %p488 = por %p486, %p487
      %p490 = scmp.ne.s32.totalorder %s473, %s489
      %p491 = scmp.eq.s32.totalorder %s43, 0
      %p492 = por %p490, %p491
      %s493 = ssub.s32 %s37, %s44
      %p494 = scmp.eq.s32.totalorder %s493, 0
      %s496 = sadd.s32 %s495, 1
      %s497 = scalar_select %p494, %s495, %s496
      %p500 = pneg %p494
      %p501 = scmp.eq.s32.totalorder %s37, 1
      %p502 = por %p500, %p501
      %p503 = scmp.ne.s32.totalorder %s495, %s498
      %p504 = scmp.eq.s32.totalorder %s37, 0
      %p505 = por %p503, %p504
      %p506 = scmp.ne.s32.totalorder %s495, %s498
      %p507 = scmp.eq.s32.totalorder %s42, 1
      %p508 = por %p506, %p507
      %p509 = scmp.ne.s32.totalorder %s498, %s499
      %p510 = scmp.eq.s32.totalorder %s42, 0
      %p511 = por %p509, %p510
      %p512 = scmp.ne.s32.totalorder %s498, %s499
      %p513 = scmp.eq.s32.totalorder %s43, 1
      %p514 = por %p512, %p513
      %p516 = scmp.ne.s32.totalorder %s499, %s515
      %p517 = scmp.eq.s32.totalorder %s43, 0
      %p518 = por %p516, %p517
      %s519 = ssub.s32 %s37, %s44
      %p520 = scmp.eq.s32.totalorder %s519, 0
      %s522 = sadd.s32 %s521, 1
      %s523 = scalar_select %p520, %s521, %s522
      %p526 = pneg %p520
      %p527 = scmp.eq.s32.totalorder %s37, 1
      %p528 = por %p526, %p527
      %p529 = scmp.ne.s32.totalorder %s521, %s524
      %p530 = scmp.eq.s32.totalorder %s37, 0
      %p531 = por %p529, %p530
      %p532 = scmp.ne.s32.totalorder %s521, %s524
      %p533 = scmp.eq.s32.totalorder %s42, 1
      %p534 = por %p532, %p533
      %p535 = scmp.ne.s32.totalorder %s524, %s525
      %p536 = scmp.eq.s32.totalorder %s42, 0
      %p537 = por %p535, %p536
      %p538 = scmp.ne.s32.totalorder %s524, %s525
      %p539 = scmp.eq.s32.totalorder %s43, 1
      %p540 = por %p538, %p539
      %p542 = scmp.ne.s32.totalorder %s525, %s541
      %p543 = scmp.eq.s32.totalorder %s43, 0
      %p544 = por %p542, %p543
      %s546 = sadd.s32 %s545, 1
      %p549 = scmp.eq.s32.totalorder %s37, 1
      %p550 = scmp.ne.s32.totalorder %s545, %s547
      %p551 = scmp.eq.s32.totalorder %s37, 0
      %p552 = por %p550, %p551
      %p553 = scmp.ne.s32.totalorder %s545, %s547
      %p554 = scmp.eq.s32.totalorder %s42, 1
      %p555 = por %p553, %p554
      %p556 = scmp.ne.s32.totalorder %s547, %s548
      %p557 = scmp.eq.s32.totalorder %s42, 0
      %p558 = por %p556, %p557
      %p559 = scmp.ne.s32.totalorder %s547, %s548
      %p560 = scmp.eq.s32.totalorder %s43, 1
      %p561 = por %p559, %p560
      %p563 = scmp.ne.s32.totalorder %s548, %s562
      %p564 = scmp.eq.s32.totalorder %s43, 0
      %p565 = por %p563, %p564
      %s567 = sadd.s32 %s566, 1
      %p570 = scmp.eq.s32.totalorder %s37, 1
      %p571 = scmp.ne.s32.totalorder %s566, %s568
      %p572 = scmp.eq.s32.totalorder %s37, 0
      %p573 = por %p571, %p572
      %p574 = scmp.ne.s32.totalorder %s566, %s568
      %p575 = scmp.eq.s32.totalorder %s42, 1
      %p576 = por %p574, %p575
      %p577 = scmp.ne.s32.totalorder %s568, %s569
      %p578 = scmp.eq.s32.totalorder %s42, 0
      %p579 = por %p577, %p578
      %p580 = scmp.ne.s32.totalorder %s568, %s569
      %p581 = scmp.eq.s32.totalorder %s43, 1
      %p582 = por %p580, %p581
      %p584 = scmp.ne.s32.totalorder %s569, %s583
      %p585 = scmp.eq.s32.totalorder %s43, 0
      %p586 = por %p584, %p585
      %s588 = sadd.s32 %s587, 1
      %p591 = scmp.eq.s32.totalorder %s37, 1
      %p592 = scmp.ne.s32.totalorder %s587, %s589
      %p593 = scmp.eq.s32.totalorder %s37, 0
      %p594 = por %p592, %p593
      %p595 = scmp.ne.s32.totalorder %s587, %s589
      %p596 = scmp.eq.s32.totalorder %s42, 1
      %p597 = por %p595, %p596
      %p598 = scmp.ne.s32.totalorder %s589, %s590
      %p599 = scmp.eq.s32.totalorder %s42, 0
      %p600 = por %p598, %p599
      %p601 = scmp.ne.s32.totalorder %s589, %s590
      %p602 = scmp.eq.s32.totalorder %s43, 1
      %p603 = por %p601, %p602
      %p605 = scmp.ne.s32.totalorder %s590, %s604
      %p606 = scmp.eq.s32.totalorder %s43, 0
      %p607 = por %p605, %p606
      %p608 = scmp.le.s32.totalorder 1, %s37
      %p609 = scmp.lt.s32.totalorder %s37, 3
      %p610 = pnand %p608, %p609
      %p611 = pneg %p610
      // Predicated region
      $region9: #{tpu_custom_call.1} parent=5 // pred_check
        _
      $region10: #{tpu_custom_call.1} parent=5 // pred_check_branch
        %613 = sbr.rel (%p610) target = $region12
      $region11: #{tpu_custom_call.1} parent=5 // pred_region
        %s614 = ssub.s32 %s37, 1
        // Predicated region
        $region13: #{tpu_custom_call.1} parent=11 // pred_check
          %p615 = pneg %p58
        $region14: #{tpu_custom_call.1} parent=11 // pred_check_branch
          %617 = sbr.rel (%p615) target = $region16
        $region15: #{tpu_custom_call.1} parent=11 // pred_region
          %s619 = ssub.s32 256, 256
          %620 = vsyncadd [#allocation5], %s619
          %s621 = sshll.u32 [#allocation4], 4
          %s622 = int_to_ptr.vmem [resolvable:$true] %s621
          %627 = dma.hbm_to_vmem [thread:$0]  %s0, 256, %s622, [#allocation5], 128, 128, 8
        $region16: #{tpu_custom_call.1} parent=11 // pred_fallthru
          _
        // Predicated region
        $region17: #{tpu_custom_call.1} parent=11 // pred_check
          %p628 = pneg %p79
        $region18: #{tpu_custom_call.1} parent=11 // pred_check_branch
          %630 = sbr.rel (%p628) target = $region20
        $region19: #{tpu_custom_call.1} parent=11 // pred_region
          _
        $region20: #{tpu_custom_call.1} parent=11 // pred_fallthru
          _
        // Predicated region
        $region21: #{tpu_custom_call.1} parent=11 // pred_check
          %p631 = pneg %p100
        $region22: #{tpu_custom_call.1} parent=11 // pred_check_branch
          %633 = sbr.rel (%p631) target = $region24
        $region23: #{tpu_custom_call.1} parent=11 // pred_region
          %s635 = ssub.s32 16, 16
          %636 = vsyncadd [#allocation8], %s635
          %s638 = sshll.u32 [#allocation7], 4
          %s639 = int_to_ptr.vmem [resolvable:$true] %s638
          %641 = dma.hbm_to_vmem [thread:$0]  %s2, 16, %s639, [#allocation8]
        $region24: #{tpu_custom_call.1} parent=11 // pred_fallthru
          _
        // Predicated region
        $region25: #{tpu_custom_call.1} parent=11 // pred_check
          %p642 = pneg %p121
        $region26: #{tpu_custom_call.1} parent=11 // pred_check_branch
          %644 = sbr.rel (%p642) target = $region28
        $region27: #{tpu_custom_call.1} parent=11 // pred_region
          %s646 = ssub.s32 16, 16
          %647 = vsyncadd [#allocation8], %s646
          %s649 = sshll.u32 [#allocation9], 4
          %s650 = int_to_ptr.vmem [resolvable:$true] %s649
          %652 = dma.hbm_to_vmem [thread:$0]  %s3, 16, %s650, [#allocation8]
        $region28: #{tpu_custom_call.1} parent=11 // pred_fallthru
          _
        // Predicated region
        $region29: #{tpu_custom_call.1} parent=11 // pred_check
          %p653 = pneg %p558
        $region30: #{tpu_custom_call.1} parent=11 // pred_check_branch
          %655 = sbr.rel (%p653) target = $region32
        $region31: #{tpu_custom_call.1} parent=11 // pred_region
          _
        $region32: #{tpu_custom_call.1} parent=11 // pred_fallthru
          _
        // Predicated region
        $region33: #{tpu_custom_call.1} parent=11 // pred_check
          %p656 = pneg %p579
        $region34: #{tpu_custom_call.1} parent=11 // pred_check_branch
          %658 = sbr.rel (%p656) target = $region36
        $region35: #{tpu_custom_call.1} parent=11 // pred_region
          _
        $region36: #{tpu_custom_call.1} parent=11 // pred_fallthru
          _
      $region12: #{tpu_custom_call.1} parent=5 // pred_fallthru
        _
      %p659 = scmp.lt.s32.totalorder %s37, 2
      // Predicated region
      $region37: #{tpu_custom_call.1} parent=5 // pred_check
        %p660 = pneg %p659
      $region38: #{tpu_custom_call.1} parent=5 // pred_check_branch
        %662 = sbr.rel (%p660) target = $region40
      $region39: #{tpu_custom_call.1} parent=5 // pred_region
        // Predicated region
        $region41: #{tpu_custom_call.1} parent=39 // pred_check
          %p663 = pneg %p141
        $region42: #{tpu_custom_call.1} parent=39 // pred_check_branch
          %665 = sbr.rel (%p663) target = $region44
        $region43: #{tpu_custom_call.1} parent=39 // pred_region
          %p666 = scmp.lt.s32.totalorder %s37, 1
          %s667 = scalar_select %p666, %s37, 1
          %s668 = smul.addr %s667, 4
          %s669 = smul.addr %s668, 4
          %s670 = scalar_lea.vmem %s4, %s669
        $region44: #{tpu_custom_call.1} parent=39 // pred_fallthru
          _
        // Predicated region
        $region45: #{tpu_custom_call.1} parent=39 // pred_check
          %p671 = pneg %p167
        $region46: #{tpu_custom_call.1} parent=39 // pred_check_branch
          %673 = sbr.rel (%p671) target = $region48
        $region47: #{tpu_custom_call.1} parent=39 // pred_region
          %s674 = sand.u32 %s37, 1
          %s675 = scalar_lea.sflag [#allocation11], %s674
          %s676 = sand.u32 %s157, 1
          %s677 = scalar_lea.vmem [#allocation10], %s676
          %s679 = ssub.s32 16, 16
          %680 = vsyncadd %s675, %s679
          %s681 = smul.addr %s37, 16
          %s682 = scalar_lea.hbm %s5, %s681
          %s684 = sshll.u32 %s677, 4
          %s685 = int_to_ptr.vmem [resolvable:$true] %s684
          %687 = dma.hbm_to_vmem [thread:$0]  %s682, 16, %s685, %s675
        $region48: #{tpu_custom_call.1} parent=39 // pred_fallthru
          _
        // Predicated region
        $region49: #{tpu_custom_call.1} parent=39 // pred_check
          %p688 = pneg %p193
        $region50: #{tpu_custom_call.1} parent=39 // pred_check_branch
          %690 = sbr.rel (%p688) target = $region52
        $region51: #{tpu_custom_call.1} parent=39 // pred_region
          %p691 = scmp.lt.s32.totalorder %s37, 1
          %s692 = scalar_select %p691, %s37, 1
          %s693 = smul.addr %s692, 4
          %s694 = smul.addr %s693, 4
          %s695 = scalar_lea.vmem %s6, %s694
        $region52: #{tpu_custom_call.1} parent=39 // pred_fallthru
          _
        // Predicated region
        $region53: #{tpu_custom_call.1} parent=39 // pred_check
          %p696 = pneg %p219
        $region54: #{tpu_custom_call.1} parent=39 // pred_check_branch
          %698 = sbr.rel (%p696) target = $region56
        $region55: #{tpu_custom_call.1} parent=39 // pred_region
          %p699 = scmp.lt.s32.totalorder %s37, 1
          %s700 = scalar_select %p699, %s37, 1
          %s701 = scalar_lea.vmem %s7, %s700
        $region56: #{tpu_custom_call.1} parent=39 // pred_fallthru
          _
        // Predicated region
        $region57: #{tpu_custom_call.1} parent=39 // pred_check
          %p702 = pneg %p245
        $region58: #{tpu_custom_call.1} parent=39 // pred_check_branch
          %704 = sbr.rel (%p702) target = $region60
        $region59: #{tpu_custom_call.1} parent=39 // pred_region
          %p705 = scmp.lt.s32.totalorder %s37, 1
          %s706 = scalar_select %p705, %s37, 1
          %s707 = smul.addr %s706, 4
          %s708 = smul.addr %s707, 4
          %s709 = scalar_lea.vmem %s8, %s708
        $region60: #{tpu_custom_call.1} parent=39 // pred_fallthru
          _
        // Predicated region
        $region61: #{tpu_custom_call.1} parent=39 // pred_check
          %p710 = pneg %p271
        $region62: #{tpu_custom_call.1} parent=39 // pred_check_branch
          %712 = sbr.rel (%p710) target = $region64
        $region63: #{tpu_custom_call.1} parent=39 // pred_region
          %p713 = scmp.lt.s32.totalorder %s37, 1
          %s714 = scalar_select %p713, %s37, 1
          %s715 = scalar_lea.vmem %s9, %s714
        $region64: #{tpu_custom_call.1} parent=39 // pred_fallthru
          _
        // Predicated region
        $region65: #{tpu_custom_call.1} parent=39 // pred_check
          %p716 = pneg %p297
        $region66: #{tpu_custom_call.1} parent=39 // pred_check_branch
          %718 = sbr.rel (%p716) target = $region68
        $region67: #{tpu_custom_call.1} parent=39 // pred_region
          %s719 = sand.u32 %s37, 1
          %s720 = scalar_lea.sflag [#allocation11], %s719
          %s721 = sand.u32 %s287, 1
          %s722 = smul.addr %s721, 16
          %s723 = scalar_lea.vmem [#allocation12], %s722
          %s725 = ssub.s32 256, 256
          %726 = vsyncadd %s720, %s725
          %s727 = smul.addr %s37, 4
          %s728 = smul.addr %s727, 64
          %s729 = scalar_lea.hbm %s10, %s728
          %s730 = sshll.u32 %s723, 4
          %s731 = int_to_ptr.vmem [resolvable:$true] %s730
          %736 = dma.hbm_to_vmem [thread:$0]  %s729, 256, %s731, %s720, 64, 64, 4
        $region68: #{tpu_custom_call.1} parent=39 // pred_fallthru
          _
        // Predicated region
        $region69: #{tpu_custom_call.1} parent=39 // pred_check
          %p737 = pneg %p323
        $region70: #{tpu_custom_call.1} parent=39 // pred_check_branch
          %739 = sbr.rel (%p737) target = $region72
        $region71: #{tpu_custom_call.1} parent=39 // pred_region
          %p740 = scmp.lt.s32.totalorder %s37, 1
          %s741 = scalar_select %p740, %s37, 1
          %s742 = scalar_lea.vmem %s11, %s741
        $region72: #{tpu_custom_call.1} parent=39 // pred_fallthru
          _
        // Predicated region
        $region73: #{tpu_custom_call.1} parent=39 // pred_check
          %p743 = pneg %p349
        $region74: #{tpu_custom_call.1} parent=39 // pred_check_branch
          %745 = sbr.rel (%p743) target = $region76
        $region75: #{tpu_custom_call.1} parent=39 // pred_region
          %p746 = scmp.lt.s32.totalorder %s37, 1
          %s747 = scalar_select %p746, %s37, 1
          %s748 = scalar_lea.vmem %s12, %s747
        $region76: #{tpu_custom_call.1} parent=39 // pred_fallthru
          _
        // Predicated region
        $region77: #{tpu_custom_call.1} parent=39 // pred_check
          %p749 = pneg %p375
        $region78: #{tpu_custom_call.1} parent=39 // pred_check_branch
          %751 = sbr.rel (%p749) target = $region80
        $region79: #{tpu_custom_call.1} parent=39 // pred_region
          %p752 = scmp.lt.s32.totalorder %s37, 1
          %s753 = scalar_select %p752, %s37, 1
          %s754 = scalar_lea.vmem %s13, %s753
        $region80: #{tpu_custom_call.1} parent=39 // pred_fallthru
          _
        // Predicated region
        $region81: #{tpu_custom_call.1} parent=39 // pred_check
          %p755 = pneg %p401
        $region82: #{tpu_custom_call.1} parent=39 // pred_check_branch
          %757 = sbr.rel (%p755) target = $region84
        $region83: #{tpu_custom_call.1} parent=39 // pred_region
          %s758 = sand.u32 %s37, 1
          %s759 = scalar_lea.sflag [#allocation14], %s758
          %s760 = sand.u32 %s391, 1
          %s761 = smul.addr %s760, 16
          %s762 = scalar_lea.vmem [#allocation13], %s761
          %s764 = ssub.s32 256, 256
          %765 = vsyncadd %s759, %s764
          %s766 = smul.addr %s37, 4
          %s767 = smul.addr %s766, 64
          %s768 = scalar_lea.hbm %s14, %s767
          %s769 = sshll.u32 %s762, 4
          %s770 = int_to_ptr.vmem [resolvable:$true] %s769
          %775 = dma.hbm_to_vmem [thread:$0]  %s768, 256, %s770, %s759, 64, 64, 4
        $region84: #{tpu_custom_call.1} parent=39 // pred_fallthru
          _
        // Predicated region
        $region85: #{tpu_custom_call.1} parent=39 // pred_check
          %p776 = pneg %p427
        $region86: #{tpu_custom_call.1} parent=39 // pred_check_branch
          %778 = sbr.rel (%p776) target = $region88
        $region87: #{tpu_custom_call.1} parent=39 // pred_region
          %s779 = sand.u32 %s37, 1
          %s780 = scalar_lea.sflag [#allocation14], %s779
          %s781 = sand.u32 %s417, 1
          %s782 = scalar_lea.vmem [#allocation15], %s781
          %s784 = ssub.s32 16, 16
          %785 = vsyncadd %s780, %s784
          %s786 = smul.addr %s37, 16
          %s787 = scalar_lea.hbm %s15, %s786
          %s789 = sshll.u32 %s782, 4
          %s790 = int_to_ptr.vmem [resolvable:$true] %s789
          %792 = dma.hbm_to_vmem [thread:$0]  %s787, 16, %s790, %s780
        $region88: #{tpu_custom_call.1} parent=39 // pred_fallthru
          _
        // Predicated region
        $region89: #{tpu_custom_call.1} parent=39 // pred_check
          %p793 = pneg %p453
        $region90: #{tpu_custom_call.1} parent=39 // pred_check_branch
          %795 = sbr.rel (%p793) target = $region92
        $region91: #{tpu_custom_call.1} parent=39 // pred_region
          %p796 = scmp.lt.s32.totalorder %s37, 1
          %s797 = scalar_select %p796, %s37, 1
          %s798 = smul.addr %s797, 8
          %s799 = smul.addr %s798, 4
          %s800 = scalar_lea.vmem %s16, %s799
        $region92: #{tpu_custom_call.1} parent=39 // pred_fallthru
          _
        // Predicated region
        $region93: #{tpu_custom_call.1} parent=39 // pred_check
          %p801 = pneg %p479
        $region94: #{tpu_custom_call.1} parent=39 // pred_check_branch
          %803 = sbr.rel (%p801) target = $region96
        $region95: #{tpu_custom_call.1} parent=39 // pred_region
          %p804 = scmp.lt.s32.totalorder %s37, 1
          %s805 = scalar_select %p804, %s37, 1
          %s806 = scalar_lea.vmem %s17, %s805
        $region96: #{tpu_custom_call.1} parent=39 // pred_fallthru
          _
        // Predicated region
        $region97: #{tpu_custom_call.1} parent=39 // pred_check
          %p807 = pneg %p505
        $region98: #{tpu_custom_call.1} parent=39 // pred_check_branch
          %809 = sbr.rel (%p807) target = $region100
        $region99: #{tpu_custom_call.1} parent=39 // pred_region
          %p810 = scmp.lt.s32.totalorder %s37, 1
          %s811 = scalar_select %p810, %s37, 1
          %s812 = scalar_lea.vmem %s18, %s811
        $region100: #{tpu_custom_call.1} parent=39 // pred_fallthru
          _
        // Predicated region
        $region101: #{tpu_custom_call.1} parent=39 // pred_check
          %p813 = pneg %p531
        $region102: #{tpu_custom_call.1} parent=39 // pred_check_branch
          %815 = sbr.rel (%p813) target = $region104
        $region103: #{tpu_custom_call.1} parent=39 // pred_region
          %p816 = scmp.lt.s32.totalorder %s37, 1
          %s817 = scalar_select %p816, %s37, 1
          %s818 = scalar_lea.vmem %s19, %s817
        $region104: #{tpu_custom_call.1} parent=39 // pred_fallthru
          _
      $region40: #{tpu_custom_call.1} parent=5 // pred_fallthru
        _
      %p819 = scmp.le.s32.totalorder 1, %s37
      %p820 = scmp.lt.s32.totalorder %s37, 3
      %p821 = pnand %p819, %p820
      %p822 = pneg %p821
      // Predicated region
      $region105: #{tpu_custom_call.1} parent=5 // pred_check
        _
      $region106: #{tpu_custom_call.1} parent=5 // pred_check_branch
        %824 = sbr.rel (%p821) target = $region108
      $region107: #{tpu_custom_call.1} parent=5 // pred_region
        %s825 = ssub.s32 %s37, 1
        // Predicated region
        $region109: #{tpu_custom_call.1} parent=107 // pred_check
          %p826 = pneg %p58
        $region110: #{tpu_custom_call.1} parent=107 // pred_check_branch
          %828 = sbr.rel (%p826) target = $region112
        $region111: #{tpu_custom_call.1} parent=107 // pred_region
          %829 = dma.done [#allocation5], 256
        $region112: #{tpu_custom_call.1} parent=107 // pred_fallthru
          _
        // Predicated region
        $region113: #{tpu_custom_call.1} parent=107 // pred_check
          %p830 = pneg %p100
        $region114: #{tpu_custom_call.1} parent=107 // pred_check_branch
          %832 = sbr.rel (%p830) target = $region116
        $region115: #{tpu_custom_call.1} parent=107 // pred_region
          %833 = dma.done [#allocation8], 16
        $region116: #{tpu_custom_call.1} parent=107 // pred_fallthru
          _
        // Predicated region
        $region117: #{tpu_custom_call.1} parent=107 // pred_check
          %p834 = pneg %p121
        $region118: #{tpu_custom_call.1} parent=107 // pred_check_branch
          %836 = sbr.rel (%p834) target = $region120
        $region119: #{tpu_custom_call.1} parent=107 // pred_region
          %837 = dma.done [#allocation8], 16
        $region120: #{tpu_custom_call.1} parent=107 // pred_fallthru
          _
        %s838 = sand.u32 %s42, 1
        %s839 = scalar_lea.sflag [#allocation11], %s838
        %s840 = sand.u32 %s160, 1
        %s841 = scalar_lea.vmem [#allocation10], %s840
        // Predicated region
        $region121: #{tpu_custom_call.1} parent=107 // pred_check
          %p842 = pneg %p173
        $region122: #{tpu_custom_call.1} parent=107 // pred_check_branch
          %844 = sbr.rel (%p842) target = $region124
        $region123: #{tpu_custom_call.1} parent=107 // pred_region
          %845 = dma.done %s839, 16
        $region124: #{tpu_custom_call.1} parent=107 // pred_fallthru
          _
        %s846 = sand.u32 %s42, 1
        %s847 = scalar_lea.sflag [#allocation11], %s846
        %s848 = sand.u32 %s290, 1
        %s849 = smul.addr %s848, 16
        %s850 = scalar_lea.vmem [#allocation12], %s849
        // Predicated region
        $region125: #{tpu_custom_call.1} parent=107 // pred_check
          %p851 = pneg %p303
        $region126: #{tpu_custom_call.1} parent=107 // pred_check_branch
          %853 = sbr.rel (%p851) target = $region128
        $region127: #{tpu_custom_call.1} parent=107 // pred_region
          %854 = dma.done %s847, 256
        $region128: #{tpu_custom_call.1} parent=107 // pred_fallthru
          _
        %s855 = sand.u32 %s42, 1
        %s856 = scalar_lea.sflag [#allocation14], %s855
        %s857 = sand.u32 %s394, 1
        %s858 = smul.addr %s857, 16
        %s859 = scalar_lea.vmem [#allocation13], %s858
        // Predicated region
        $region129: #{tpu_custom_call.1} parent=107 // pred_check
          %p860 = pneg %p407
        $region130: #{tpu_custom_call.1} parent=107 // pred_check_branch
          %862 = sbr.rel (%p860) target = $region132
        $region131: #{tpu_custom_call.1} parent=107 // pred_region
          %863 = dma.done %s856, 256
        $region132: #{tpu_custom_call.1} parent=107 // pred_fallthru
          _
        %s864 = sand.u32 %s42, 1
        %s865 = scalar_lea.sflag [#allocation14], %s864
        %s866 = sand.u32 %s420, 1
        %s867 = scalar_lea.vmem [#allocation15], %s866
        // Predicated region
        $region133: #{tpu_custom_call.1} parent=107 // pred_check
          %p868 = pneg %p433
        $region134: #{tpu_custom_call.1} parent=107 // pred_check_branch
          %870 = sbr.rel (%p868) target = $region136
        $region135: #{tpu_custom_call.1} parent=107 // pred_region
          %871 = dma.done %s865, 16
        $region136: #{tpu_custom_call.1} parent=107 // pred_fallthru
          _
        %p872 = pneg %p58
        %p873 = pneg %p55
        %p874 = pneg %p79
        %p875 = pneg %p76
        %p876 = pneg %p100
        %p877 = pneg %p97
        %p878 = pneg %p121
        %p879 = pneg %p118
        %p880 = scmp.lt.s32.totalorder %s42, 1
        %s881 = scalar_select %p880, %s42, 1
        %s882 = smul.addr %s881, 4
        %s883 = smul.addr %s882, 4
        %s884 = scalar_lea.vmem %s4, %s883
        %p885 = pneg %p147
        %p886 = pneg %p144
        %s887 = sand.u32 %s42, 1
        %s888 = scalar_lea.sflag [#allocation11], %s887
        %s889 = sand.u32 %s160, 1
        %s890 = scalar_lea.vmem [#allocation10], %s889
        %p891 = pneg %p173
        %p892 = pneg %p170
        %p893 = scmp.lt.s32.totalorder %s42, 1
        %s894 = scalar_select %p893, %s42, 1
        %s895 = smul.addr %s894, 4
        %s896 = smul.addr %s895, 4
        %s897 = scalar_lea.vmem %s6, %s896
        %p898 = pneg %p199
        %p899 = pneg %p196
        %p900 = scmp.lt.s32.totalorder %s42, 1
        %s901 = scalar_select %p900, %s42, 1
        %s902 = scalar_lea.vmem %s7, %s901
        %p903 = pneg %p225
        %p904 = pneg %p222
        %p905 = scmp.lt.s32.totalorder %s42, 1
        %s906 = scalar_select %p905, %s42, 1
        %s907 = smul.addr %s906, 4
        %s908 = smul.addr %s907, 4
        %s909 = scalar_lea.vmem %s8, %s908
        %p910 = pneg %p251
        %p911 = pneg %p248
        %p912 = scmp.lt.s32.totalorder %s42, 1
        %s913 = scalar_select %p912, %s42, 1
        %s914 = scalar_lea.vmem %s9, %s913
        %p915 = pneg %p277
        %p916 = pneg %p274
        %s917 = sand.u32 %s42, 1
        %s918 = scalar_lea.sflag [#allocation11], %s917
        %s919 = sand.u32 %s290, 1
        %s920 = smul.addr %s919, 16
        %s921 = scalar_lea.vmem [#allocation12], %s920
        %p922 = pneg %p303
        %p923 = pneg %p300
        %p924 = scmp.lt.s32.totalorder %s42, 1
        %s925 = scalar_select %p924, %s42, 1
        %s926 = scalar_lea.vmem %s11, %s925
        %p927 = pneg %p329
        %p928 = pneg %p326
        %p929 = scmp.lt.s32.totalorder %s42, 1
        %s930 = scalar_select %p929, %s42, 1
        %s931 = scalar_lea.vmem %s12, %s930
        %p932 = pneg %p355
        %p933 = pneg %p352
        %p934 = scmp.lt.s32.totalorder %s42, 1
        %s935 = scalar_select %p934, %s42, 1
        %s936 = scalar_lea.vmem %s13, %s935
        %p937 = pneg %p381
        %p938 = pneg %p378
        %s939 = sand.u32 %s42, 1
        %s940 = scalar_lea.sflag [#allocation14], %s939
        %s941 = sand.u32 %s394, 1
        %s942 = smul.addr %s941, 16
        %s943 = scalar_lea.vmem [#allocation13], %s942
        %p944 = pneg %p407
        %p945 = pneg %p404
        %s946 = sand.u32 %s42, 1
        %s947 = scalar_lea.sflag [#allocation14], %s946
        %s948 = sand.u32 %s420, 1
        %s949 = scalar_lea.vmem [#allocation15], %s948
        %p950 = pneg %p433
        %p951 = pneg %p430
        %p952 = scmp.lt.s32.totalorder %s42, 1
        %s953 = scalar_select %p952, %s42, 1
        %s954 = smul.addr %s953, 8
        %s955 = smul.addr %s954, 4
        %s956 = scalar_lea.vmem %s16, %s955
        %p957 = pneg %p459
        %p958 = pneg %p456
        %p959 = scmp.lt.s32.totalorder %s42, 1
        %s960 = scalar_select %p959, %s42, 1
        %s961 = scalar_lea.vmem %s17, %s960
        %p962 = pneg %p485
        %p963 = pneg %p482
        %p964 = scmp.lt.s32.totalorder %s42, 1
        %s965 = scalar_select %p964, %s42, 1
        %s966 = scalar_lea.vmem %s18, %s965
        %p967 = pneg %p511
        %p968 = pneg %p508
        %p969 = scmp.lt.s32.totalorder %s42, 1
        %s970 = scalar_select %p969, %s42, 1
        %s971 = scalar_lea.vmem %s19, %s970
        %p972 = pneg %p537
        %p973 = pneg %p534
        %p974 = pneg %p558
        %p975 = pneg %p555
        %p976 = pneg %p579
        %p977 = pneg %p576
        %p978 = pneg %p600
        %p979 = pneg %p597
        %p980 = scmp.lt.s32.totalorder %s42, 1
        %s981 = scalar_select %p980, %s42, 1
        %s982 = smul.addr %s981, 4
        %s983 = smul.addr %s982, 4
        %s984 = scalar_lea.vmem %s4, %s983
        %p985 = scmp.lt.s32.totalorder %s42, 1
        %s986 = scalar_select %p985, %s42, 1
        %s987 = smul.addr %s986, 4
        %s988 = smul.addr %s987, 4
        %s989 = scalar_lea.vmem %s6, %s988
        %p990 = scmp.lt.s32.totalorder %s42, 1
        %s991 = scalar_select %p990, %s42, 1
        %s992 = scalar_lea.vmem %s7, %s991
        %p993 = scmp.lt.s32.totalorder %s42, 1
        %s994 = scalar_select %p993, %s42, 1
        %s995 = smul.addr %s994, 4
        %s996 = smul.addr %s995, 4
        %s997 = scalar_lea.vmem %s8, %s996
        %p998 = scmp.lt.s32.totalorder %s42, 1
        %s999 = scalar_select %p998, %s42, 1
        %s1000 = scalar_lea.vmem %s9, %s999
        %p1001 = scmp.lt.s32.totalorder %s42, 1
        %s1002 = scalar_select %p1001, %s42, 1
        %s1003 = scalar_lea.vmem %s11, %s1002
        %p1004 = scmp.lt.s32.totalorder %s42, 1
        %s1005 = scalar_select %p1004, %s42, 1
        %s1006 = scalar_lea.vmem %s12, %s1005
        %p1007 = scmp.lt.s32.totalorder %s42, 1
        %s1008 = scalar_select %p1007, %s42, 1
        %s1009 = scalar_lea.vmem %s13, %s1008
        %p1010 = scmp.lt.s32.totalorder %s42, 1
        %s1011 = scalar_select %p1010, %s42, 1
        %s1012 = smul.addr %s1011, 8
        %s1013 = smul.addr %s1012, 4
        %s1014 = scalar_lea.vmem %s16, %s1013
        %p1015 = scmp.lt.s32.totalorder %s42, 1
        %s1016 = scalar_select %p1015, %s42, 1
        %s1017 = scalar_lea.vmem %s17, %s1016
        %p1018 = scmp.lt.s32.totalorder %s42, 1
        %s1019 = scalar_select %p1018, %s42, 1
        %s1020 = scalar_lea.vmem %s18, %s1019
        %p1021 = scmp.lt.s32.totalorder %s42, 1
        %s1022 = scalar_select %p1021, %s42, 1
        %s1023 = scalar_lea.vmem %s19, %s1022
        %p1025 = scmp.eq.s32.totalorder %s42, 0
        // Predicated region
        $region137: #{tpu_custom_call.1} parent=107 // pred_check
          %p1026 = pneg %p1025
        $region138: #{tpu_custom_call.1} parent=107 // pred_check_branch
          %1028 = sbr.rel (%p1026) target = $region140
        $region139: #{tpu_custom_call.1} parent=107 // pred_region
          %v1029 = vld [vmem:[#allocation4] sm:$0xff]
          %v1030 = vld [vmem:[#allocation4 + $0x8] sm:$0xff]
          %v1031 = vld [vmem:[#allocation7] sm:$0x1]
          %v1032 = vld [vmem:[#allocation9] sm:$0x1]
          %vm1033 = vcmask 261120
          %v1034 = vsel %vm1033, %v1029, 0.0
          %1035 = vadd.xlane.f32.xlu0 %v1034
          %v1036 = vpop.xlane.xlu0 %1035
          %v1037 = vsel %vm1033, %v1030, 0.0
          %1038 = vadd.xlane.f32.xlu0 %v1037
          %v1039 = vpop.xlane.xlu0 %1038
          %v1040 = vrcp.pop 32.0
          %v1041 = vmul.f32 %v1036, %v1040
          %v1042 = vmul.f32 %v1039, %v1040
          %v1043 = vsub.f32 %v1029, %v1041
          %v1044 = vsub.f32 %v1030, %v1042
          %v1045 = vmul.f32 %v1043, %v1043
          %v1046 = vmul.f32 %v1044, %v1044
          %v1047 = vsel %vm1033, %v1045, 0.0
          %1048 = vadd.xlane.f32.xlu0 %v1047
          %v1049 = vpop.xlane.xlu0 %1048
          %v1050 = vsel %vm1033, %v1046, 0.0
          %1051 = vadd.xlane.f32.xlu0 %v1050
          %v1052 = vpop.xlane.xlu0 %1051
          %v1053 = vmul.f32 %v1049, %v1040
          %v1054 = vmul.f32 %v1052, %v1040
          %v1055 = vadd.f32 %v1053, 1e-12
          %v1056 = vadd.f32 %v1054, 1e-12
          %v1057 = vrsqrt.pop %v1055
          %v1058 = vrsqrt.pop %v1056
          %v1059 = vmul.f32 %v1043, %v1057
          %v1060 = vmul.f32 %v1044, %v1058
          %v1062 = vlaneseq
          %v1063 = vshrl.u32 %v1062, 7
          %v1064 = vsub.s32 0, %v1063
          %v1065 = vrot.slane %v1031, %v1064
          %v1067 = vmul.f32 %v1059, %v1065
          %v1068 = vmul.f32 %v1060, %v1065
          %v1070 = vlaneseq
          %v1071 = vshrl.u32 %v1070, 7
          %v1072 = vsub.s32 0, %v1071
          %v1073 = vrot.slane %v1032, %v1072
          %v1075 = vadd.f32 %v1067, %v1073
          %v1076 = vadd.f32 %v1068, %v1073
          %1077 = vst.msk [vmem:[#allocation2] sm:$0xff] %vm1033, %v1075
          %1078 = vst.msk [vmem:[#allocation2 + $0x8] sm:$0xff] %vm1033, %v1076
        $region140: #{tpu_custom_call.1} parent=107 // pred_fallthru
          _
        %v1079 = vld [vmem:[#allocation2] sm:$0xff]
        %v1080 = vld [vmem:[#allocation2 + $0x8] sm:$0xff]
        %v1081 = vpack.c.bf16 %v1080, %v1079
        %v1082 = vld [vmem:[%s984] sm:$0xf]
        %v1083 = vld [vmem:[%s984 + $0x4] sm:$0xf]
        %v1084 = vld [vmem:[%s984 + $0x8] sm:$0xf]
        %v1085 = vld [vmem:[%s984 + $0xc] sm:$0xf]
        %v1086 = vld [vmem:[%s841] sm:$0x1]
        %v1088 = vlaneseq
        %v1089 = vshrl.u32 %v1088, 7
        %v1090 = vsub.s32 0, %v1089
        %v1091 = vrot.slane %v1086, %v1090
        %v1097 = vunpack.c.l.b16 %v1082
        %v1098 = vunpack.c.l.b16 %v1083
        %v1099 = vunpack.c.l.b16 %v1084
        %v1100 = vunpack.c.l.b16 %v1085
        %v1101 = vpack.c.b16 %v1098, %v1097
        %v1102 = vpack.c.b16 %v1100, %v1099
        %vm1105 = vcmask 261120
        %v1107 = vsel %vm1105, %v1081, 0
        %1109 = vmatprep.subr.bf16.mxu0 0
        %1110 = vmatpush1.bf16.msra.mxu0 %v1101
        %1111 = vmatprep.subr.bf16.mxu0 0
        %1112 = vmatpush1.bf16.msra.mxu0 %v1102
        %1113 = vmatprep.subr.bf16.mxu0 0
        %1114 = vmatpush1.bf16.msra.mxu0 0
        %1115 = vmatprep.subr.bf16.mxu0 0
        %1116 = vmatpush1.bf16.msra.mxu0 0
        %1117 = vmatprep.subr.bf16.mxu0 0
        %1118 = vmatpush1.bf16.msra.mxu0 0
        %1119 = vmatprep.subr.bf16.mxu0 0
        %1120 = vmatpush1.bf16.msra.mxu0 0
        %1121 = vmatprep.subr.bf16.mxu0 0
        %1122 = vmatpush1.bf16.msra.mxu0 0
        %1123 = vmatprep.subr.bf16.mxu0 0
        %1124 = vmatpush1.bf16.msra.mxu0 0
        %1125 = vmatprep.subr.bf16.mxu0 0
        %1126 = vmatpush1.bf16.msra.mxu0 0
        %1127 = vmatprep.subr.bf16.mxu0 0
        %1128 = vmatpush1.bf16.msra.mxu0 0
        %1129 = vmatprep.subr.bf16.mxu0 0
        %1130 = vmatpush1.bf16.msra.mxu0 0
        %1131 = vmatprep.subr.bf16.mxu0 0
        %1132 = vmatpush1.bf16.msra.mxu0 0
        %1133 = vmatprep.subr.bf16.mxu0 0
        %1134 = vmatpush1.bf16.msra.mxu0 0
        %1135 = vmatprep.subr.bf16.mxu0 0
        %1136 = vmatpush1.bf16.msra.mxu0 0
        %1137 = vmatprep.subr.bf16.mxu0 0
        %1138 = vmatpush1.bf16.msra.mxu0 0
        %1139 = vmatprep.subr.bf16.mxu0 0
        %1140 = vmatpush1.bf16.msra.mxu0 0
        %1141 = vmatprep.mubr.bf16.mxu0 0
        %1142 = vmatmul.mubr.bf16.gmra.mrb[0].mxu0 %v1107
        %v1143 = vpop.f32.mrb[0].mxu0
        %v1144 = vadd.f32 %v1091, %v1143
        %v1145 = vpop.f32.mrb[0].mxu0
        %v1146 = vpop.f32.mrb[0].mxu0
        %v1147 = vadd.f32 %v1091, %v1146
        %v1148 = vpop.f32.mrb[0].mxu0
        %1149 = vdwg.mxu0
        %v1150 = vld [vmem:[%s989] sm:$0xf]
        %v1151 = vld [vmem:[%s989 + $0x4] sm:$0xf]
        %v1152 = vld [vmem:[%s989 + $0x8] sm:$0xf]
        %v1153 = vld [vmem:[%s989 + $0xc] sm:$0xf]
        %v1154 = vld [vmem:[%s992] sm:$0x1]
        %v1156 = vlaneseq
        %v1157 = vshrl.u32 %v1156, 7
        %v1158 = vsub.s32 0, %v1157
        %v1159 = vrot.slane %v1154, %v1158
        %v1165 = vunpack.c.l.b16 %v1150
        %v1166 = vunpack.c.l.b16 %v1151
        %v1167 = vunpack.c.l.b16 %v1152
        %v1168 = vunpack.c.l.b16 %v1153
        %v1169 = vpack.c.b16 %v1166, %v1165
        %v1170 = vpack.c.b16 %v1168, %v1167
        %1173 = vmatprep.subr.bf16.mxu0 0
        %1174 = vmatpush1.bf16.msra.mxu0 %v1169
        %1175 = vmatprep.subr.bf16.mxu0 0
        %1176 = vmatpush1.bf16.msra.mxu0 %v1170
        %1177 = vmatprep.subr.bf16.mxu0 0
        %1178 = vmatpush1.bf16.msra.mxu0 0
        %1179 = vmatprep.subr.bf16.mxu0 0
        %1180 = vmatpush1.bf16.msra.mxu0 0
        %1181 = vmatprep.subr.bf16.mxu0 0
        %1182 = vmatpush1.bf16.msra.mxu0 0
        %1183 = vmatprep.subr.bf16.mxu0 0
        %1184 = vmatpush1.bf16.msra.mxu0 0
        %1185 = vmatprep.subr.bf16.mxu0 0
        %1186 = vmatpush1.bf16.msra.mxu0 0
        %1187 = vmatprep.subr.bf16.mxu0 0
        %1188 = vmatpush1.bf16.msra.mxu0 0
        %1189 = vmatprep.subr.bf16.mxu0 0
        %1190 = vmatpush1.bf16.msra.mxu0 0
        %1191 = vmatprep.subr.bf16.mxu0 0
        %1192 = vmatpush1.bf16.msra.mxu0 0
        %1193 = vmatprep.subr.bf16.mxu0 0
        %1194 = vmatpush1.bf16.msra.mxu0 0
        %1195 = vmatprep.subr.bf16.mxu0 0
        %1196 = vmatpush1.bf16.msra.mxu0 0
        %1197 = vmatprep.subr.bf16.mxu0 0
        %1198 = vmatpush1.bf16.msra.mxu0 0
        %1199 = vmatprep.subr.bf16.mxu0 0
        %1200 = vmatpush1.bf16.msra.mxu0 0
        %1201 = vmatprep.subr.bf16.mxu0 0
        %1202 = vmatpush1.bf16.msra.mxu0 0
        %1203 = vmatprep.subr.bf16.mxu0 0
        %1204 = vmatpush1.bf16.msra.mxu0 0
        %1205 = vmatprep.mubr.bf16.mxu0 0
        %1206 = vmatmul.mubr.bf16.gmra.mrb[0].mxu0 %v1107
        %v1207 = vpop.f32.mrb[0].mxu0
        %v1208 = vadd.f32 %v1159, %v1207
        %v1209 = vpop.f32.mrb[0].mxu0
        %v1210 = vpop.f32.mrb[0].mxu0
        %v1211 = vadd.f32 %v1159, %v1210
        %v1212 = vpop.f32.mrb[0].mxu0
        %1213 = vdwg.mxu0
        %v1214 = vld [vmem:[%s997] sm:$0xf]
        %v1215 = vld [vmem:[%s997 + $0x4] sm:$0xf]
        %v1216 = vld [vmem:[%s997 + $0x8] sm:$0xf]
        %v1217 = vld [vmem:[%s997 + $0xc] sm:$0xf]
        %v1218 = vld [vmem:[%s1000] sm:$0x1]
        %v1220 = vlaneseq
        %v1221 = vshrl.u32 %v1220, 7
        %v1222 = vsub.s32 0, %v1221
        %v1223 = vrot.slane %v1218, %v1222
        %v1229 = vunpack.c.l.b16 %v1214
        %v1230 = vunpack.c.l.b16 %v1215
        %v1231 = vunpack.c.l.b16 %v1216
        %v1232 = vunpack.c.l.b16 %v1217
        %v1233 = vpack.c.b16 %v1230, %v1229
        %v1234 = vpack.c.b16 %v1232, %v1231
        %1237 = vmatprep.subr.bf16.mxu0 0
        %1238 = vmatpush1.bf16.msra.mxu0 %v1233
        %1239 = vmatprep.subr.bf16.mxu0 0
        %1240 = vmatpush1.bf16.msra.mxu0 %v1234
        %1241 = vmatprep.subr.bf16.mxu0 0
        %1242 = vmatpush1.bf16.msra.mxu0 0
        %1243 = vmatprep.subr.bf16.mxu0 0
        %1244 = vmatpush1.bf16.msra.mxu0 0
        %1245 = vmatprep.subr.bf16.mxu0 0
        %1246 = vmatpush1.bf16.msra.mxu0 0
        %1247 = vmatprep.subr.bf16.mxu0 0
        %1248 = vmatpush1.bf16.msra.mxu0 0
        %1249 = vmatprep.subr.bf16.mxu0 0
        %1250 = vmatpush1.bf16.msra.mxu0 0
        %1251 = vmatprep.subr.bf16.mxu0 0
        %1252 = vmatpush1.bf16.msra.mxu0 0
        %1253 = vmatprep.subr.bf16.mxu0 0
        %1254 = vmatpush1.bf16.msra.mxu0 0
        %1255 = vmatprep.subr.bf16.mxu0 0
        %1256 = vmatpush1.bf16.msra.mxu0 0
        %1257 = vmatprep.subr.bf16.mxu0 0
        %1258 = vmatpush1.bf16.msra.mxu0 0
        %1259 = vmatprep.subr.bf16.mxu0 0
        %1260 = vmatpush1.bf16.msra.mxu0 0
        %1261 = vmatprep.subr.bf16.mxu0 0
        %1262 = vmatpush1.bf16.msra.mxu0 0
        %1263 = vmatprep.subr.bf16.mxu0 0
        %1264 = vmatpush1.bf16.msra.mxu0 0
        %1265 = vmatprep.subr.bf16.mxu0 0
        %1266 = vmatpush1.bf16.msra.mxu0 0
        %1267 = vmatprep.subr.bf16.mxu0 0
        %1268 = vmatpush1.bf16.msra.mxu0 0
        %1269 = vmatprep.mubr.bf16.mxu0 0
        %1270 = vmatmul.mubr.bf16.gmra.mrb[0].mxu0 %v1107
        %v1271 = vpop.f32.mrb[0].mxu0
        %v1272 = vadd.f32 %v1223, %v1271
        %v1273 = vpop.f32.mrb[0].mxu0
        %v1274 = vpop.f32.mrb[0].mxu0
        %v1275 = vadd.f32 %v1223, %v1274
        %v1276 = vpop.f32.mrb[0].mxu0
        %1277 = vdwg.mxu0
        %v1278 = vld [vmem:[%s1] sm:$0x1]
        %v1279 = vld [vmem:[%s1 + $0x1] sm:$0x1]
        %v1282 = vlaneseq
        %v1283 = vshrl.u32 %v1282, 7
        %v1284 = vsub.s32 0, %v1283
        %v1285 = vrot.slane %v1278, %v1284
        %v1286 = vlaneseq
        %v1287 = vshrl.u32 %v1286, 7
        %v1288 = vsub.s32 0, %v1287
        %v1289 = vrot.slane %v1279, %v1288
        %v1292 = vpack.c.bf16 %v1144, %v1144
        %v1293 = vpack.c.bf16 %v1147, %v1147
        %v1294 = vpack.c.bf16 %v1208, %v1208
        %v1295 = vpack.c.bf16 %v1211, %v1211
        %v1296 = vpack.c.bf16 %v1272, %v1272
        %v1297 = vpack.c.bf16 %v1275, %v1275
        %vm1298 = vcmask 130048
        %v1300 = vsel %vm1298, %v1292, 0
        %v1303 = vsel %vm1298, %v1294, 0
        %1305 = vmatprep.subr.bf16.mxu0 0
        %1306 = vmatpush1.bf16.xpose.msra.mxu0 %v1303
        %1307 = vmatprep.subr.bf16.mxu0 0
        %1308 = vmatpush1.bf16.xpose.msra.mxu0 0
        %1309 = vmatprep.subr.bf16.mxu0 0
        %1310 = vmatpush1.bf16.xpose.msra.mxu0 0
        %1311 = vmatprep.subr.bf16.mxu0 0
        %1312 = vmatpush1.bf16.xpose.msra.mxu0 0
        %1313 = vmatprep.subr.bf16.mxu0 0
        %1314 = vmatpush1.bf16.xpose.msra.mxu0 0
        %1315 = vmatprep.subr.bf16.mxu0 0
        %1316 = vmatpush1.bf16.xpose.msra.mxu0 0
        %1317 = vmatprep.subr.bf16.mxu0 0
        %1318 = vmatpush1.bf16.xpose.msra.mxu0 0
        %1319 = vmatprep.subr.bf16.mxu0 0
        %1320 = vmatpush1.bf16.xpose.msra.mxu0 0
        %1321 = vmatprep.subr.bf16.mxu0 0
        %1322 = vmatpush1.bf16.xpose.msra.mxu0 0
        %1323 = vmatprep.subr.bf16.mxu0 0
        %1324 = vmatpush1.bf16.xpose.msra.mxu0 0
        %1325 = vmatprep.subr.bf16.mxu0 0
        %1326 = vmatpush1.bf16.xpose.msra.mxu0 0
        %1327 = vmatprep.subr.bf16.mxu0 0
        %1328 = vmatpush1.bf16.xpose.msra.mxu0 0
        %1329 = vmatprep.subr.bf16.mxu0 0
        %1330 = vmatpush1.bf16.xpose.msra.mxu0 0
        %1331 = vmatprep.subr.bf16.mxu0 0
        %1332 = vmatpush1.bf16.xpose.msra.mxu0 0
        %1333 = vmatprep.subr.bf16.mxu0 0
        %1334 = vmatpush1.bf16.xpose.msra.mxu0 0
        %1335 = vmatprep.subr.bf16.mxu0 0
        %1336 = vmatpush1.bf16.xpose.msra.mxu0 0
        %1337 = vmatprep.mubr.bf16.mxu0 0
        %1338 = vmatmul.mubr.bf16.gmra.mrb[0].mxu0 %v1300
        %v1339 = vpop.f32.mrb[0].mxu0
        %v1340 = vadd.f32 0.0, %v1339
        %v1341 = vpop.f32.mrb[0].mxu0
        %v1342 = vpop.f32.mrb[0].mxu0
        %v1343 = vpop.f32.mrb[0].mxu0
        %1344 = vdwg.mxu0
        %v1346 = vsel %vm1298, %v1293, 0
        %v1349 = vsel %vm1298, %v1295, 0
        %1351 = vmatprep.subr.bf16.mxu0 0
        %1352 = vmatpush1.bf16.xpose.msra.mxu0 %v1349
        %1353 = vmatprep.subr.bf16.mxu0 0
        %1354 = vmatpush1.bf16.xpose.msra.mxu0 0
        %1355 = vmatprep.subr.bf16.mxu0 0
        %1356 = vmatpush1.bf16.xpose.msra.mxu0 0
        %1357 = vmatprep.subr.bf16.mxu0 0
        %1358 = vmatpush1.bf16.xpose.msra.mxu0 0
        %1359 = vmatprep.subr.bf16.mxu0 0
        %1360 = vmatpush1.bf16.xpose.msra.mxu0 0
        %1361 = vmatprep.subr.bf16.mxu0 0
        %1362 = vmatpush1.bf16.xpose.msra.mxu0 0
        %1363 = vmatprep.subr.bf16.mxu0 0
        %1364 = vmatpush1.bf16.xpose.msra.mxu0 0
        %1365 = vmatprep.subr.bf16.mxu0 0
        %1366 = vmatpush1.bf16.xpose.msra.mxu0 0
        %1367 = vmatprep.subr.bf16.mxu0 0
        %1368 = vmatpush1.bf16.xpose.msra.mxu0 0
        %1369 = vmatprep.subr.bf16.mxu0 0
        %1370 = vmatpush1.bf16.xpose.msra.mxu0 0
        %1371 = vmatprep.subr.bf16.mxu0 0
        %1372 = vmatpush1.bf16.xpose.msra.mxu0 0
        %1373 = vmatprep.subr.bf16.mxu0 0
        %1374 = vmatpush1.bf16.xpose.msra.mxu0 0
        %1375 = vmatprep.subr.bf16.mxu0 0
        %1376 = vmatpush1.bf16.xpose.msra.mxu0 0
        %1377 = vmatprep.subr.bf16.mxu0 0
        %1378 = vmatpush1.bf16.xpose.msra.mxu0 0
        %1379 = vmatprep.subr.bf16.mxu0 0
        %1380 = vmatpush1.bf16.xpose.msra.mxu0 0
        %1381 = vmatprep.subr.bf16.mxu0 0
        %1382 = vmatpush1.bf16.xpose.msra.mxu0 0
        %1383 = vmatprep.mubr.bf16.mxu0 0
        %1384 = vmatmul.mubr.bf16.gmra.mrb[0].mxu0 %v1346
        %v1385 = vpop.f32.mrb[0].mxu0
        %v1386 = vadd.f32 0.0, %v1385
        %v1387 = vpop.f32.mrb[0].mxu0
        %v1388 = vpop.f32.mrb[0].mxu0
        %v1389 = vpop.f32.mrb[0].mxu0
        %1390 = vdwg.mxu0
        %v1391 = vmul.f32 %v1340, 0.25
        %v1392 = vmul.f32 %v1386, 0.25
        %v1393 = vadd.f32 %v1391, %v1285
        %v1394 = vadd.f32 %v1392, %v1289
        %vm1395 = vcmask 64512
        %v1396 = vsel %vm1395, %v1393, -inf
        %1397 = vmax.xlane.f32.xlu0 %v1396
        %v1398 = vpop.xlane.xlu0 %1397
        %v1399 = vsel %vm1395, %v1394, -inf
        %1400 = vmax.xlane.f32.xlu0 %v1399
        %v1401 = vpop.xlane.xlu0 %1400
        %v1402 = vsub.f32 %v1393, %v1398
        %v1403 = vsub.f32 %v1394, %v1401
        %v1404 = vmul.f32 %v1402, 1.442695
        %v1405 = vpow.pop %v1404
        %v1406 = vmul.f32 %v1403, 1.442695
        %v1407 = vpow.pop %v1406
        %v1408 = vsel %vm1395, %v1405, 0.0
        %1409 = vadd.xlane.f32.xlu0 %v1408
        %v1410 = vpop.xlane.xlu0 %1409
        %v1411 = vsel %vm1395, %v1407, 0.0
        %1412 = vadd.xlane.f32.xlu0 %v1411
        %v1413 = vpop.xlane.xlu0 %1412
        %v1414 = vrcp.pop %v1410
        %v1415 = vrcp.pop %v1413
        %v1416 = vmul.f32 %v1405, %v1414
        %v1417 = vmul.f32 %v1407, %v1415
        %v1418 = vpack.c.bf16 %v1416, %v1416
        %v1419 = vpack.c.bf16 %v1417, %v1417
        %v1421 = vsel %vm1395, %v1418, 0
        %vm1423 = vcmask 1043456
        %v1425 = vsel %vm1423, %v1296, 0
        %1427 = vmatprep.subr.bf16.mxu0 0
        %1428 = vmatpush1.bf16.msra.mxu0 %v1425
        %1429 = vmatprep.subr.bf16.mxu0 0
        %1430 = vmatpush1.bf16.msra.mxu0 0
        %1431 = vmatprep.subr.bf16.mxu0 0
        %1432 = vmatpush1.bf16.msra.mxu0 0
        %1433 = vmatprep.subr.bf16.mxu0 0
        %1434 = vmatpush1.bf16.msra.mxu0 0
        %1435 = vmatprep.subr.bf16.mxu0 0
        %1436 = vmatpush1.bf16.msra.mxu0 0
        %1437 = vmatprep.subr.bf16.mxu0 0
        %1438 = vmatpush1.bf16.msra.mxu0 0
        %1439 = vmatprep.subr.bf16.mxu0 0
        %1440 = vmatpush1.bf16.msra.mxu0 0
        %1441 = vmatprep.subr.bf16.mxu0 0
        %1442 = vmatpush1.bf16.msra.mxu0 0
        %1443 = vmatprep.subr.bf16.mxu0 0
        %1444 = vmatpush1.bf16.msra.mxu0 0
        %1445 = vmatprep.subr.bf16.mxu0 0
        %1446 = vmatpush1.bf16.msra.mxu0 0
        %1447 = vmatprep.subr.bf16.mxu0 0
        %1448 = vmatpush1.bf16.msra.mxu0 0
        %1449 = vmatprep.subr.bf16.mxu0 0
        %1450 = vmatpush1.bf16.msra.mxu0 0
        %1451 = vmatprep.subr.bf16.mxu0 0
        %1452 = vmatpush1.bf16.msra.mxu0 0
        %1453 = vmatprep.subr.bf16.mxu0 0
        %1454 = vmatpush1.bf16.msra.mxu0 0
        %1455 = vmatprep.subr.bf16.mxu0 0
        %1456 = vmatpush1.bf16.msra.mxu0 0
        %1457 = vmatprep.subr.bf16.mxu0 0
        %1458 = vmatpush1.bf16.msra.mxu0 0
        %1459 = vmatprep.mubr.bf16.mxu0 0
        %1460 = vmatmul.mubr.bf16.gmra.mrb[0].mxu0 %v1421
        %v1461 = vpop.f32.mrb[0].mxu0
        %v1462 = vadd.f32 0.0, %v1461
        %v1463 = vpop.f32.mrb[0].mxu0
        %v1464 = vpop.f32.mrb[0].mxu0
        %v1465 = vpop.f32.mrb[0].mxu0
        %1466 = vdwg.mxu0
        %v1468 = vsel %vm1395, %v1419, 0
        %v1471 = vsel %vm1423, %v1297, 0
        %1473 = vmatprep.subr.bf16.mxu0 0
        %1474 = vmatpush1.bf16.msra.mxu0 %v1471
        %1475 = vmatprep.subr.bf16.mxu0 0
        %1476 = vmatpush1.bf16.msra.mxu0 0
        %1477 = vmatprep.subr.bf16.mxu0 0
        %1478 = vmatpush1.bf16.msra.mxu0 0
        %1479 = vmatprep.subr.bf16.mxu0 0
        %1480 = vmatpush1.bf16.msra.mxu0 0
        %1481 = vmatprep.subr.bf16.mxu0 0
        %1482 = vmatpush1.bf16.msra.mxu0 0
        %1483 = vmatprep.subr.bf16.mxu0 0
        %1484 = vmatpush1.bf16.msra.mxu0 0
        %1485 = vmatprep.subr.bf16.mxu0 0
        %1486 = vmatpush1.bf16.msra.mxu0 0
        %1487 = vmatprep.subr.bf16.mxu0 0
        %1488 = vmatpush1.bf16.msra.mxu0 0
        %1489 = vmatprep.subr.bf16.mxu0 0
        %1490 = vmatpush1.bf16.msra.mxu0 0
        %1491 = vmatprep.subr.bf16.mxu0 0
        %1492 = vmatpush1.bf16.msra.mxu0 0
        %1493 = vmatprep.subr.bf16.mxu0 0
        %1494 = vmatpush1.bf16.msra.mxu0 0
        %1495 = vmatprep.subr.bf16.mxu0 0
        %1496 = vmatpush1.bf16.msra.mxu0 0
        %1497 = vmatprep.subr.bf16.mxu0 0
        %1498 = vmatpush1.bf16.msra.mxu0 0
        %1499 = vmatprep.subr.bf16.mxu0 0
        %1500 = vmatpush1.bf16.msra.mxu0 0
        %1501 = vmatprep.subr.bf16.mxu0 0
        %1502 = vmatpush1.bf16.msra.mxu0 0
        %1503 = vmatprep.subr.bf16.mxu0 0
        %1504 = vmatpush1.bf16.msra.mxu0 0
        %1505 = vmatprep.mubr.bf16.mxu0 0
        %1506 = vmatmul.mubr.bf16.gmra.mrb[0].mxu0 %v1468
        %v1507 = vpop.f32.mrb[0].mxu0
        %v1508 = vadd.f32 0.0, %v1507
        %v1509 = vpop.f32.mrb[0].mxu0
        %v1510 = vpop.f32.mrb[0].mxu0
        %v1511 = vpop.f32.mrb[0].mxu0
        %1512 = vdwg.mxu0
        %1513 = vst.msk [vmem:[#allocation3] sm:$0xff] %vm1298, %v1462
        %1514 = vst.msk [vmem:[#allocation3 + $0x8] sm:$0xff] %vm1298, %v1508
        %1516 = vrot.lane.b32.xlu0 %v1292, 112
        %v1517 = vpop.permute.xlu0 %1516
        %1519 = vrot.lane.b32.xlu0 %v1294, 112
        %v1520 = vpop.permute.xlu0 %1519
        %v1522 = vsel %vm1298, %v1517, 0
        %v1525 = vsel %vm1298, %v1520, 0
        %1527 = vmatprep.subr.bf16.mxu0 0
        %1528 = vmatpush1.bf16.xpose.msra.mxu0 %v1525
        %1529 = vmatprep.subr.bf16.mxu0 0
        %1530 = vmatpush1.bf16.xpose.msra.mxu0 0
        %1531 = vmatprep.subr.bf16.mxu0 0
        %1532 = vmatpush1.bf16.xpose.msra.mxu0 0
        %1533 = vmatprep.subr.bf16.mxu0 0
        %1534 = vmatpush1.bf16.xpose.msra.mxu0 0
        %1535 = vmatprep.subr.bf16.mxu0 0
        %1536 = vmatpush1.bf16.xpose.msra.mxu0 0
        %1537 = vmatprep.subr.bf16.mxu0 0
        %1538 = vmatpush1.bf16.xpose.msra.mxu0 0
        %1539 = vmatprep.subr.bf16.mxu0 0
        %1540 = vmatpush1.bf16.xpose.msra.mxu0 0
        %1541 = vmatprep.subr.bf16.mxu0 0
        %1542 = vmatpush1.bf16.xpose.msra.mxu0 0
        %1543 = vmatprep.subr.bf16.mxu0 0
        %1544 = vmatpush1.bf16.xpose.msra.mxu0 0
        %1545 = vmatprep.subr.bf16.mxu0 0
        %1546 = vmatpush1.bf16.xpose.msra.mxu0 0
        %1547 = vmatprep.subr.bf16.mxu0 0
        %1548 = vmatpush1.bf16.xpose.msra.mxu0 0
        %1549 = vmatprep.subr.bf16.mxu0 0
        %1550 = vmatpush1.bf16.xpose.msra.mxu0 0
        %1551 = vmatprep.subr.bf16.mxu0 0
        %1552 = vmatpush1.bf16.xpose.msra.mxu0 0
        %1553 = vmatprep.subr.bf16.mxu0 0
        %1554 = vmatpush1.bf16.xpose.msra.mxu0 0
        %1555 = vmatprep.subr.bf16.mxu0 0
        %1556 = vmatpush1.bf16.xpose.msra.mxu0 0
        %1557 = vmatprep.subr.bf16.mxu0 0
        %1558 = vmatpush1.bf16.xpose.msra.mxu0 0
        %1559 = vmatprep.mubr.bf16.mxu0 0
        %1560 = vmatmul.mubr.bf16.gmra.mrb[0].mxu0 %v1522
        %v1561 = vpop.f32.mrb[0].mxu0
        %v1562 = vadd.f32 0.0, %v1561
        %v1563 = vpop.f32.mrb[0].mxu0
        %v1564 = vpop.f32.mrb[0].mxu0
        %v1565 = vpop.f32.mrb[0].mxu0
        %1566 = vdwg.mxu0
        %1568 = vrot.lane.b32.xlu0 %v1293, 112
        %v1569 = vpop.permute.xlu0 %1568
        %1571 = vrot.lane.b32.xlu0 %v1295, 112
        %v1572 = vpop.permute.xlu0 %1571
        %v1574 = vsel %vm1298, %v1569, 0
        %v1577 = vsel %vm1298, %v1572, 0
        %1579 = vmatprep.subr.bf16.mxu0 0
        %1580 = vmatpush1.bf16.xpose.msra.mxu0 %v1577
        %1581 = vmatprep.subr.bf16.mxu0 0
        %1582 = vmatpush1.bf16.xpose.msra.mxu0 0
        %1583 = vmatprep.subr.bf16.mxu0 0
        %1584 = vmatpush1.bf16.xpose.msra.mxu0 0
        %1585 = vmatprep.subr.bf16.mxu0 0
        %1586 = vmatpush1.bf16.xpose.msra.mxu0 0
        %1587 = vmatprep.subr.bf16.mxu0 0
        %1588 = vmatpush1.bf16.xpose.msra.mxu0 0
        %1589 = vmatprep.subr.bf16.mxu0 0
        %1590 = vmatpush1.bf16.xpose.msra.mxu0 0
        %1591 = vmatprep.subr.bf16.mxu0 0
        %1592 = vmatpush1.bf16.xpose.msra.mxu0 0
        %1593 = vmatprep.subr.bf16.mxu0 0
        %1594 = vmatpush1.bf16.xpose.msra.mxu0 0
        %1595 = vmatprep.subr.bf16.mxu0 0
        %1596 = vmatpush1.bf16.xpose.msra.mxu0 0
        %1597 = vmatprep.subr.bf16.mxu0 0
        %1598 = vmatpush1.bf16.xpose.msra.mxu0 0
        %1599 = vmatprep.subr.bf16.mxu0 0
        %1600 = vmatpush1.bf16.xpose.msra.mxu0 0
        %1601 = vmatprep.subr.bf16.mxu0 0
        %1602 = vmatpush1.bf16.xpose.msra.mxu0 0
        %1603 = vmatprep.subr.bf16.mxu0 0
        %1604 = vmatpush1.bf16.xpose.msra.mxu0 0
        %1605 = vmatprep.subr.bf16.mxu0 0
        %1606 = vmatpush1.bf16.xpose.msra.mxu0 0
        %1607 = vmatprep.subr.bf16.mxu0 0
        %1608 = vmatpush1.bf16.xpose.msra.mxu0 0
        %1609 = vmatprep.subr.bf16.mxu0 0
        %1610 = vmatpush1.bf16.xpose.msra.mxu0 0
        %1611 = vmatprep.mubr.bf16.mxu0 0
        %1612 = vmatmul.mubr.bf16.gmra.mrb[0].mxu0 %v1574
        %v1613 = vpop.f32.mrb[0].mxu0
        %v1614 = vadd.f32 0.0, %v1613
        %v1615 = vpop.f32.mrb[0].mxu0
        %v1616 = vpop.f32.mrb[0].mxu0
        %v1617 = vpop.f32.mrb[0].mxu0
        %1618 = vdwg.mxu0
        %v1619 = vmul.f32 %v1562, 0.25
        %v1620 = vmul.f32 %v1614, 0.25
        %v1621 = vadd.f32 %v1619, %v1285
        %v1622 = vadd.f32 %v1620, %v1289
        %v1623 = vsel %vm1395, %v1621, -inf
        %1624 = vmax.xlane.f32.xlu0 %v1623
        %v1625 = vpop.xlane.xlu0 %1624
        %v1626 = vsel %vm1395, %v1622, -inf
        %1627 = vmax.xlane.f32.xlu0 %v1626
        %v1628 = vpop.xlane.xlu0 %1627
        %v1629 = vsub.f32 %v1621, %v1625
        %v1630 = vsub.f32 %v1622, %v1628
        %v1631 = vmul.f32 %v1629, 1.442695
        %v1632 = vpow.pop %v1631
        %v1633 = vmul.f32 %v1630, 1.442695
        %v1634 = vpow.pop %v1633
        %v1635 = vsel %vm1395, %v1632, 0.0
        %1636 = vadd.xlane.f32.xlu0 %v1635
        %v1637 = vpop.xlane.xlu0 %1636
        %v1638 = vsel %vm1395, %v1634, 0.0
        %1639 = vadd.xlane.f32.xlu0 %v1638
        %v1640 = vpop.xlane.xlu0 %1639
        %v1641 = vrcp.pop %v1637
        %v1642 = vrcp.pop %v1640
        %v1643 = vmul.f32 %v1632, %v1641
        %v1644 = vmul.f32 %v1634, %v1642
        %v1645 = vpack.c.bf16 %v1643, %v1643
        %v1646 = vpack.c.bf16 %v1644, %v1644
        %1648 = vrot.lane.b32.xlu0 %v1296, 112
        %v1649 = vpop.permute.xlu0 %1648
        %v1651 = vsel %vm1395, %v1645, 0
        %v1654 = vsel %vm1423, %v1649, 0
        %1656 = vmatprep.subr.bf16.mxu0 0
        %1657 = vmatpush1.bf16.msra.mxu0 %v1654
        %1658 = vmatprep.subr.bf16.mxu0 0
        %1659 = vmatpush1.bf16.msra.mxu0 0
        %1660 = vmatprep.subr.bf16.mxu0 0
        %1661 = vmatpush1.bf16.msra.mxu0 0
        %1662 = vmatprep.subr.bf16.mxu0 0
        %1663 = vmatpush1.bf16.msra.mxu0 0
        %1664 = vmatprep.subr.bf16.mxu0 0
        %1665 = vmatpush1.bf16.msra.mxu0 0
        %1666 = vmatprep.subr.bf16.mxu0 0
        %1667 = vmatpush1.bf16.msra.mxu0 0
        %1668 = vmatprep.subr.bf16.mxu0 0
        %1669 = vmatpush1.bf16.msra.mxu0 0
        %1670 = vmatprep.subr.bf16.mxu0 0
        %1671 = vmatpush1.bf16.msra.mxu0 0
        %1672 = vmatprep.subr.bf16.mxu0 0
        %1673 = vmatpush1.bf16.msra.mxu0 0
        %1674 = vmatprep.subr.bf16.mxu0 0
        %1675 = vmatpush1.bf16.msra.mxu0 0
        %1676 = vmatprep.subr.bf16.mxu0 0
        %1677 = vmatpush1.bf16.msra.mxu0 0
        %1678 = vmatprep.subr.bf16.mxu0 0
        %1679 = vmatpush1.bf16.msra.mxu0 0
        %1680 = vmatprep.subr.bf16.mxu0 0
        %1681 = vmatpush1.bf16.msra.mxu0 0
        %1682 = vmatprep.subr.bf16.mxu0 0
        %1683 = vmatpush1.bf16.msra.mxu0 0
        %1684 = vmatprep.subr.bf16.mxu0 0
        %1685 = vmatpush1.bf16.msra.mxu0 0
        %1686 = vmatprep.subr.bf16.mxu0 0
        %1687 = vmatpush1.bf16.msra.mxu0 0
        %1688 = vmatprep.mubr.bf16.mxu0 0
        %1689 = vmatmul.mubr.bf16.gmra.mrb[0].mxu0 %v1651
        %v1690 = vpop.f32.mrb[0].mxu0
        %v1691 = vadd.f32 0.0, %v1690
        %v1692 = vpop.f32.mrb[0].mxu0
        %v1693 = vpop.f32.mrb[0].mxu0
        %v1694 = vpop.f32.mrb[0].mxu0
        %1695 = vdwg.mxu0
        %1697 = vrot.lane.b32.xlu0 %v1297, 112
        %v1698 = vpop.permute.xlu0 %1697
        %v1700 = vsel %vm1395, %v1646, 0
        %v1703 = vsel %vm1423, %v1698, 0
        %1705 = vmatprep.subr.bf16.mxu0 0
        %1706 = vmatpush1.bf16.msra.mxu0 %v1703
        %1707 = vmatprep.subr.bf16.mxu0 0
        %1708 = vmatpush1.bf16.msra.mxu0 0
        %1709 = vmatprep.subr.bf16.mxu0 0
        %1710 = vmatpush1.bf16.msra.mxu0 0
        %1711 = vmatprep.subr.bf16.mxu0 0
        %1712 = vmatpush1.bf16.msra.mxu0 0
        %1713 = vmatprep.subr.bf16.mxu0 0
        %1714 = vmatpush1.bf16.msra.mxu0 0
        %1715 = vmatprep.subr.bf16.mxu0 0
        %1716 = vmatpush1.bf16.msra.mxu0 0
        %1717 = vmatprep.subr.bf16.mxu0 0
        %1718 = vmatpush1.bf16.msra.mxu0 0
        %1719 = vmatprep.subr.bf16.mxu0 0
        %1720 = vmatpush1.bf16.msra.mxu0 0
        %1721 = vmatprep.subr.bf16.mxu0 0
        %1722 = vmatpush1.bf16.msra.mxu0 0
        %1723 = vmatprep.subr.bf16.mxu0 0
        %1724 = vmatpush1.bf16.msra.mxu0 0
        %1725 = vmatprep.subr.bf16.mxu0 0
        %1726 = vmatpush1.bf16.msra.mxu0 0
        %1727 = vmatprep.subr.bf16.mxu0 0
        %1728 = vmatpush1.bf16.msra.mxu0 0
        %1729 = vmatprep.subr.bf16.mxu0 0
        %1730 = vmatpush1.bf16.msra.mxu0 0
        %1731 = vmatprep.subr.bf16.mxu0 0
        %1732 = vmatpush1.bf16.msra.mxu0 0
        %1733 = vmatprep.subr.bf16.mxu0 0
        %1734 = vmatpush1.bf16.msra.mxu0 0
        %1735 = vmatprep.subr.bf16.mxu0 0
        %1736 = vmatpush1.bf16.msra.mxu0 0
        %1737 = vmatprep.mubr.bf16.mxu0 0
        %1738 = vmatmul.mubr.bf16.gmra.mrb[0].mxu0 %v1700
        %v1739 = vpop.f32.mrb[0].mxu0
        %v1740 = vadd.f32 0.0, %v1739
        %v1741 = vpop.f32.mrb[0].mxu0
        %v1742 = vpop.f32.mrb[0].mxu0
        %v1743 = vpop.f32.mrb[0].mxu0
        %1744 = vdwg.mxu0
        %1747 = vrot.lane.b32.xlu0 %v1691, 16
        %v1748 = vpop.permute.xlu0 %1747
        %1749 = vrot.lane.b32.xlu0 %v1740, 16
        %v1750 = vpop.permute.xlu0 %1749
        %vm1753 = vcmask 261248
        %1754 = vst.msk [vmem:[#allocation3] sm:$0xff] %vm1753, %v1748
        %1755 = vst.msk [vmem:[#allocation3 + $0x8] sm:$0xff] %vm1753, %v1750
        %v1756 = vld [vmem:[#allocation3] sm:$0xff]
        %v1757 = vld [vmem:[#allocation3 + $0x8] sm:$0xff]
        %v1758 = vpack.c.bf16 %v1757, %v1756
        %v1759 = vld [vmem:[%s850] sm:$0xf]
        %v1760 = vld [vmem:[%s850 + $0x4] sm:$0xf]
        %v1761 = vld [vmem:[%s850 + $0x8] sm:$0xf]
        %v1762 = vld [vmem:[%s850 + $0xc] sm:$0xf]
        %v1763 = vld [vmem:[%s1003] sm:$0x1]
        %v1765 = vlaneseq
        %v1766 = vshrl.u32 %v1765, 7
        %v1767 = vsub.s32 0, %v1766
        %v1768 = vrot.slane %v1763, %v1767
        %v1774 = vunpack.c.l.b16 %v1759
        %v1775 = vunpack.c.l.b16 %v1760
        %v1776 = vunpack.c.l.b16 %v1761
        %v1777 = vunpack.c.l.b16 %v1762
        %v1778 = vpack.c.b16 %v1775, %v1774
        %v1779 = vpack.c.b16 %v1777, %v1776
        %v1783 = vsel %vm1105, %v1758, 0
        %1785 = vmatprep.subr.bf16.mxu0 0
        %1786 = vmatpush1.bf16.msra.mxu0 %v1778
        %1787 = vmatprep.subr.bf16.mxu0 0
        %1788 = vmatpush1.bf16.msra.mxu0 %v1779
        %1789 = vmatprep.subr.bf16.mxu0 0
        %1790 = vmatpush1.bf16.msra.mxu0 0
        %1791 = vmatprep.subr.bf16.mxu0 0
        %1792 = vmatpush1.bf16.msra.mxu0 0
        %1793 = vmatprep.subr.bf16.mxu0 0
        %1794 = vmatpush1.bf16.msra.mxu0 0
        %1795 = vmatprep.subr.bf16.mxu0 0
        %1796 = vmatpush1.bf16.msra.mxu0 0
        %1797 = vmatprep.subr.bf16.mxu0 0
        %1798 = vmatpush1.bf16.msra.mxu0 0
        %1799 = vmatprep.subr.bf16.mxu0 0
        %1800 = vmatpush1.bf16.msra.mxu0 0
        %1801 = vmatprep.subr.bf16.mxu0 0
        %1802 = vmatpush1.bf16.msra.mxu0 0
        %1803 = vmatprep.subr.bf16.mxu0 0
        %1804 = vmatpush1.bf16.msra.mxu0 0
        %1805 = vmatprep.subr.bf16.mxu0 0
        %1806 = vmatpush1.bf16.msra.mxu0 0
        %1807 = vmatprep.subr.bf16.mxu0 0
        %1808 = vmatpush1.bf16.msra.mxu0 0
        %1809 = vmatprep.subr.bf16.mxu0 0
        %1810 = vmatpush1.bf16.msra.mxu0 0
        %1811 = vmatprep.subr.bf16.mxu0 0
        %1812 = vmatpush1.bf16.msra.mxu0 0
        %1813 = vmatprep.subr.bf16.mxu0 0
        %1814 = vmatpush1.bf16.msra.mxu0 0
        %1815 = vmatprep.subr.bf16.mxu0 0
        %1816 = vmatpush1.bf16.msra.mxu0 0
        %1817 = vmatprep.mubr.bf16.mxu0 0
        %1818 = vmatmul.mubr.bf16.gmra.mrb[0].mxu0 %v1783
        %v1819 = vpop.f32.mrb[0].mxu0
        %v1820 = vadd.f32 %v1768, %v1819
        %v1821 = vpop.f32.mrb[0].mxu0
        %v1822 = vpop.f32.mrb[0].mxu0
        %v1823 = vadd.f32 %v1768, %v1822
        %v1824 = vpop.f32.mrb[0].mxu0
        %1825 = vdwg.mxu0
        %v1826 = vadd.f32 %v1079, %v1820
        %v1827 = vadd.f32 %v1080, %v1823
        %v1828 = vld [vmem:[%s1006] sm:$0x1]
        %v1829 = vld [vmem:[%s1009] sm:$0x1]
        %v1830 = vsel %vm1105, %v1826, 0.0
        %1831 = vadd.xlane.f32.xlu0 %v1830
        %v1832 = vpop.xlane.xlu0 %1831
        %v1833 = vsel %vm1105, %v1827, 0.0
        %1834 = vadd.xlane.f32.xlu0 %v1833
        %v1835 = vpop.xlane.xlu0 %1834
        %v1836 = vrcp.pop 32.0
        %v1837 = vmul.f32 %v1832, %v1836
        %v1838 = vmul.f32 %v1835, %v1836
        %v1839 = vsub.f32 %v1826, %v1837
        %v1840 = vsub.f32 %v1827, %v1838
        %v1841 = vmul.f32 %v1839, %v1839
        %v1842 = vmul.f32 %v1840, %v1840
        %v1843 = vsel %vm1105, %v1841, 0.0
        %1844 = vadd.xlane.f32.xlu0 %v1843
        %v1845 = vpop.xlane.xlu0 %1844
        %v1846 = vsel %vm1105, %v1842, 0.0
        %1847 = vadd.xlane.f32.xlu0 %v1846
        %v1848 = vpop.xlane.xlu0 %1847
        %v1849 = vmul.f32 %v1845, %v1836
        %v1850 = vmul.f32 %v1848, %v1836
        %v1851 = vadd.f32 %v1849, 1e-12
        %v1852 = vadd.f32 %v1850, 1e-12
        %v1853 = vrsqrt.pop %v1851
        %v1854 = vrsqrt.pop %v1852
        %v1855 = vmul.f32 %v1839, %v1853
        %v1856 = vmul.f32 %v1840, %v1854
        %v1858 = vlaneseq
        %v1859 = vshrl.u32 %v1858, 7
        %v1860 = vsub.s32 0, %v1859
        %v1861 = vrot.slane %v1828, %v1860
        %v1863 = vmul.f32 %v1855, %v1861
        %v1864 = vmul.f32 %v1856, %v1861
        %v1866 = vlaneseq
        %v1867 = vshrl.u32 %v1866, 7
        %v1868 = vsub.s32 0, %v1867
        %v1869 = vrot.slane %v1829, %v1868
        %v1871 = vadd.f32 %v1863, %v1869
        %v1872 = vadd.f32 %v1864, %v1869
        %v1873 = vpack.c.bf16 %v1872, %v1871
        %v1874 = vld [vmem:[%s859] sm:$0xf]
        %v1875 = vld [vmem:[%s859 + $0x4] sm:$0xf]
        %v1876 = vld [vmem:[%s859 + $0x8] sm:$0xf]
        %v1877 = vld [vmem:[%s859 + $0xc] sm:$0xf]
        %v1878 = vld [vmem:[%s867] sm:$0x1]
        %v1880 = vlaneseq
        %v1881 = vshrl.u32 %v1880, 7
        %v1882 = vsub.s32 0, %v1881
        %v1883 = vrot.slane %v1878, %v1882
        %v1889 = vunpack.c.l.b16 %v1874
        %v1890 = vunpack.c.l.b16 %v1875
        %v1891 = vunpack.c.l.b16 %v1876
        %v1892 = vunpack.c.l.b16 %v1877
        %v1893 = vpack.c.b16 %v1890, %v1889
        %v1894 = vpack.c.b16 %v1892, %v1891
        %v1898 = vsel %vm1105, %v1873, 0
        %1900 = vmatprep.subr.bf16.mxu0 0
        %1901 = vmatpush1.bf16.msra.mxu0 %v1893
        %1902 = vmatprep.subr.bf16.mxu0 0
        %1903 = vmatpush1.bf16.msra.mxu0 %v1894
        %1904 = vmatprep.subr.bf16.mxu0 0
        %1905 = vmatpush1.bf16.msra.mxu0 0
        %1906 = vmatprep.subr.bf16.mxu0 0
        %1907 = vmatpush1.bf16.msra.mxu0 0
        %1908 = vmatprep.subr.bf16.mxu0 0
        %1909 = vmatpush1.bf16.msra.mxu0 0
        %1910 = vmatprep.subr.bf16.mxu0 0
        %1911 = vmatpush1.bf16.msra.mxu0 0
        %1912 = vmatprep.subr.bf16.mxu0 0
        %1913 = vmatpush1.bf16.msra.mxu0 0
        %1914 = vmatprep.subr.bf16.mxu0 0
        %1915 = vmatpush1.bf16.msra.mxu0 0
        %1916 = vmatprep.subr.bf16.mxu0 0
        %1917 = vmatpush1.bf16.msra.mxu0 0
        %1918 = vmatprep.subr.bf16.mxu0 0
        %1919 = vmatpush1.bf16.msra.mxu0 0
        %1920 = vmatprep.subr.bf16.mxu0 0
        %1921 = vmatpush1.bf16.msra.mxu0 0
        %1922 = vmatprep.subr.bf16.mxu0 0
        %1923 = vmatpush1.bf16.msra.mxu0 0
        %1924 = vmatprep.subr.bf16.mxu0 0
        %1925 = vmatpush1.bf16.msra.mxu0 0
        %1926 = vmatprep.subr.bf16.mxu0 0
        %1927 = vmatpush1.bf16.msra.mxu0 0
        %1928 = vmatprep.subr.bf16.mxu0 0
        %1929 = vmatpush1.bf16.msra.mxu0 0
        %1930 = vmatprep.subr.bf16.mxu0 0
        %1931 = vmatpush1.bf16.msra.mxu0 0
        %1932 = vmatprep.mubr.bf16.mxu0 0
        %1933 = vmatmul.mubr.bf16.gmra.mrb[0].mxu0 %v1898
        %v1934 = vpop.f32.mrb[0].mxu0
        %v1935 = vadd.f32 %v1883, %v1934
        %v1936 = vpop.f32.mrb[0].mxu0
        %v1937 = vpop.f32.mrb[0].mxu0
        %v1938 = vadd.f32 %v1883, %v1937
        %v1939 = vpop.f32.mrb[0].mxu0
        %1940 = vdwg.mxu0
        %v1941 = vmul.f32 %v1935, 0.5
        %v1942 = vmul.f32 %v1938, 0.5
        %v1943 = vmul.f32 %v1935, %v1935
        %v1944 = vmul.f32 %v1938, %v1938
        %v1945 = vmul.f32 %v1943, %v1935
        %v1946 = vmul.f32 %v1944, %v1938
        %v1947 = vmul.f32 %v1945, 0.044715
        %v1948 = vmul.f32 %v1946, 0.044715
        %v1949 = vadd.f32 %v1935, %v1947
        %v1950 = vadd.f32 %v1938, %v1948
        %v1951 = vmul.f32 %v1949, 0.7978846
        %v1952 = vmul.f32 %v1950, 0.7978846
        %v1953 = vtanh.pop %v1951
        %v1954 = vtanh.pop %v1952
        %v1955 = vadd.f32 %v1953, 1.0
        %v1956 = vadd.f32 %v1954, 1.0
        %v1957 = vmul.f32 %v1941, %v1955
        %v1958 = vmul.f32 %v1942, %v1956
        %v1959 = vpack.c.bf16 %v1958, %v1957
        %v1960 = vld [vmem:[%s1014] sm:$0xf]
        %v1961 = vld [vmem:[%s1014 + $0x4] sm:$0xf]
        %v1962 = vld [vmem:[%s1014 + $0x8] sm:$0xf]
        %v1963 = vld [vmem:[%s1014 + $0xc] sm:$0xf]
        %v1964 = vld [vmem:[%s1014 + $0x10] sm:$0xf]
        %v1965 = vld [vmem:[%s1014 + $0x14] sm:$0xf]
        %v1966 = vld [vmem:[%s1014 + $0x18] sm:$0xf]
        %v1967 = vld [vmem:[%s1014 + $0x1c] sm:$0xf]
        %v1968 = vld [vmem:[%s1017] sm:$0x1]
        %v1970 = vlaneseq
        %v1971 = vshrl.u32 %v1970, 7
        %v1972 = vsub.s32 0, %v1971
        %v1973 = vrot.slane %v1968, %v1972
        %v1983 = vunpack.c.l.b16 %v1960
        %v1984 = vunpack.c.l.b16 %v1961
        %v1985 = vunpack.c.l.b16 %v1962
        %v1986 = vunpack.c.l.b16 %v1963
        %v1987 = vunpack.c.l.b16 %v1964
        %v1988 = vunpack.c.l.b16 %v1965
        %v1989 = vunpack.c.l.b16 %v1966
        %v1990 = vunpack.c.l.b16 %v1967
        %v1991 = vpack.c.b16 %v1984, %v1983
        %v1992 = vpack.c.b16 %v1986, %v1985
        %v1993 = vpack.c.b16 %v1988, %v1987
        %v1994 = vpack.c.b16 %v1990, %v1989
        %vm1999 = vcmask 523264
        %v2001 = vsel %vm1999, %v1959, 0
        %2003 = vmatprep.subr.bf16.mxu0 0
        %2004 = vmatpush1.bf16.msra.mxu0 %v1991
        %2005 = vmatprep.subr.bf16.mxu0 0
        %2006 = vmatpush1.bf16.msra.mxu0 %v1992
        %2007 = vmatprep.subr.bf16.mxu0 0
        %2008 = vmatpush1.bf16.msra.mxu0 %v1993
        %2009 = vmatprep.subr.bf16.mxu0 0
        %2010 = vmatpush1.bf16.msra.mxu0 %v1994
        %2011 = vmatprep.subr.bf16.mxu0 0
        %2012 = vmatpush1.bf16.msra.mxu0 0
        %2013 = vmatprep.subr.bf16.mxu0 0
        %2014 = vmatpush1.bf16.msra.mxu0 0
        %2015 = vmatprep.subr.bf16.mxu0 0
        %2016 = vmatpush1.bf16.msra.mxu0 0
        %2017 = vmatprep.subr.bf16.mxu0 0
        %2018 = vmatpush1.bf16.msra.mxu0 0
        %2019 = vmatprep.subr.bf16.mxu0 0
        %2020 = vmatpush1.bf16.msra.mxu0 0
        %2021 = vmatprep.subr.bf16.mxu0 0
        %2022 = vmatpush1.bf16.msra.mxu0 0
        %2023 = vmatprep.subr.bf16.mxu0 0
        %2024 = vmatpush1.bf16.msra.mxu0 0
        %2025 = vmatprep.subr.bf16.mxu0 0
        %2026 = vmatpush1.bf16.msra.mxu0 0
        %2027 = vmatprep.subr.bf16.mxu0 0
        %2028 = vmatpush1.bf16.msra.mxu0 0
        %2029 = vmatprep.subr.bf16.mxu0 0
        %2030 = vmatpush1.bf16.msra.mxu0 0
        %2031 = vmatprep.subr.bf16.mxu0 0
        %2032 = vmatpush1.bf16.msra.mxu0 0
        %2033 = vmatprep.subr.bf16.mxu0 0
        %2034 = vmatpush1.bf16.msra.mxu0 0
        %2035 = vmatprep.mubr.bf16.mxu0 0
        %2036 = vmatmul.mubr.bf16.gmra.mrb[0].mxu0 %v2001
        %v2037 = vpop.f32.mrb[0].mxu0
        %v2038 = vadd.f32 %v1973, %v2037
        %v2039 = vpop.f32.mrb[0].mxu0
        %v2040 = vpop.f32.mrb[0].mxu0
        %v2041 = vadd.f32 %v1973, %v2040
        %v2042 = vpop.f32.mrb[0].mxu0
        %2043 = vdwg.mxu0
        %v2044 = vadd.f32 %v1871, %v2038
        %v2045 = vadd.f32 %v1872, %v2041
        %v2046 = vld [vmem:[%s1020] sm:$0x1]
        %v2047 = vld [vmem:[%s1023] sm:$0x1]
        %v2048 = vsel %vm1105, %v2044, 0.0
        %2049 = vadd.xlane.f32.xlu0 %v2048
        %v2050 = vpop.xlane.xlu0 %2049
        %v2051 = vsel %vm1105, %v2045, 0.0
        %2052 = vadd.xlane.f32.xlu0 %v2051
        %v2053 = vpop.xlane.xlu0 %2052
        %v2054 = vmul.f32 %v2050, %v1836
        %v2055 = vmul.f32 %v2053, %v1836
        %v2056 = vsub.f32 %v2044, %v2054
        %v2057 = vsub.f32 %v2045, %v2055
        %v2058 = vmul.f32 %v2056, %v2056
        %v2059 = vmul.f32 %v2057, %v2057
        %v2060 = vsel %vm1105, %v2058, 0.0
        %2061 = vadd.xlane.f32.xlu0 %v2060
        %v2062 = vpop.xlane.xlu0 %2061
        %v2063 = vsel %vm1105, %v2059, 0.0
        %2064 = vadd.xlane.f32.xlu0 %v2063
        %v2065 = vpop.xlane.xlu0 %2064
        %v2066 = vmul.f32 %v2062, %v1836
        %v2067 = vmul.f32 %v2065, %v1836
        %v2068 = vadd.f32 %v2066, 1e-12
        %v2069 = vadd.f32 %v2067, 1e-12
        %v2070 = vrsqrt.pop %v2068
        %v2071 = vrsqrt.pop %v2069
        %v2072 = vmul.f32 %v2056, %v2070
        %v2073 = vmul.f32 %v2057, %v2071
        %v2075 = vlaneseq
        %v2076 = vshrl.u32 %v2075, 7
        %v2077 = vsub.s32 0, %v2076
        %v2078 = vrot.slane %v2046, %v2077
        %v2080 = vmul.f32 %v2072, %v2078
        %v2081 = vmul.f32 %v2073, %v2078
        %v2083 = vlaneseq
        %v2084 = vshrl.u32 %v2083, 7
        %v2085 = vsub.s32 0, %v2084
        %v2086 = vrot.slane %v2047, %v2085
        %v2088 = vadd.f32 %v2080, %v2086
        %v2089 = vadd.f32 %v2081, %v2086
        %2090 = vst.msk [vmem:[#allocation2] sm:$0xff] %vm1105, %v2088
        %2091 = vst.msk [vmem:[#allocation2 + $0x8] sm:$0xff] %vm1105, %v2089
        %p2092 = scmp.eq.s32.totalorder %s42, 1
        // Predicated region
        $region141: #{tpu_custom_call.1} parent=107 // pred_check
          %p2093 = pneg %p2092
        $region142: #{tpu_custom_call.1} parent=107 // pred_check_branch
          %2095 = sbr.rel (%p2093) target = $region144
        $region143: #{tpu_custom_call.1} parent=107 // pred_region
          %v2096 = vld [vmem:[#allocation2] ss:$8 sm:$0x3]
          %v2097 = vpack.c.bf16 %v2096, %v2096
          %v2098 = vld [vmem:[%s20] sm:$0xf]
          %v2099 = vld [vmem:[%s20 + $0x4] sm:$0xf]
          %v2100 = vld [vmem:[%s20 + $0x8] sm:$0xf]
          %v2101 = vld [vmem:[%s20 + $0xc] sm:$0xf]
          %v2102 = vld [vmem:[%s21] sm:$0x1]
          %v2104 = vlaneseq
          %v2105 = vshrl.u32 %v2104, 7
          %v2106 = vsub.s32 0, %v2105
          %v2107 = vrot.slane %v2102, %v2106
          %v2113 = vunpack.c.l.b16 %v2098
          %v2114 = vunpack.c.l.b16 %v2099
          %v2115 = vunpack.c.l.b16 %v2100
          %v2116 = vunpack.c.l.b16 %v2101
          %v2117 = vpack.c.b16 %v2114, %v2113
          %v2118 = vpack.c.b16 %v2116, %v2115
          %v2122 = vsel %vm1105, %v2097, 0
          %2124 = vmatprep.subr.bf16.mxu0 0
          %2125 = vmatpush1.bf16.msra.mxu0 %v2117
          %2126 = vmatprep.subr.bf16.mxu0 0
          %2127 = vmatpush1.bf16.msra.mxu0 %v2118
          %2128 = vmatprep.subr.bf16.mxu0 0
          %2129 = vmatpush1.bf16.msra.mxu0 0
          %2130 = vmatprep.subr.bf16.mxu0 0
          %2131 = vmatpush1.bf16.msra.mxu0 0
          %2132 = vmatprep.subr.bf16.mxu0 0
          %2133 = vmatpush1.bf16.msra.mxu0 0
          %2134 = vmatprep.subr.bf16.mxu0 0
          %2135 = vmatpush1.bf16.msra.mxu0 0
          %2136 = vmatprep.subr.bf16.mxu0 0
          %2137 = vmatpush1.bf16.msra.mxu0 0
          %2138 = vmatprep.subr.bf16.mxu0 0
          %2139 = vmatpush1.bf16.msra.mxu0 0
          %2140 = vmatprep.subr.bf16.mxu0 0
          %2141 = vmatpush1.bf16.msra.mxu0 0
          %2142 = vmatprep.subr.bf16.mxu0 0
          %2143 = vmatpush1.bf16.msra.mxu0 0
          %2144 = vmatprep.subr.bf16.mxu0 0
          %2145 = vmatpush1.bf16.msra.mxu0 0
          %2146 = vmatprep.subr.bf16.mxu0 0
          %2147 = vmatpush1.bf16.msra.mxu0 0
          %2148 = vmatprep.subr.bf16.mxu0 0
          %2149 = vmatpush1.bf16.msra.mxu0 0
          %2150 = vmatprep.subr.bf16.mxu0 0
          %2151 = vmatpush1.bf16.msra.mxu0 0
          %2152 = vmatprep.subr.bf16.mxu0 0
          %2153 = vmatpush1.bf16.msra.mxu0 0
          %2154 = vmatprep.subr.bf16.mxu0 0
          %2155 = vmatpush1.bf16.msra.mxu0 0
          %2156 = vmatprep.mubr.bf16.mxu0 0
          %2157 = vmatmul.mubr.bf16.gmra.mrb[0].mxu0 %v2122
          %v2158 = vpop.f32.mrb[0].mxu0
          %v2159 = vadd.f32 %v2107, %v2158
          %v2160 = vpop.f32.mrb[0].mxu0
          %v2161 = vpop.f32.mrb[0].mxu0
          %v2162 = vpop.f32.mrb[0].mxu0
          %2163 = vdwg.mxu0
          %2164 = vst [vmem:[#allocation16] sm:$0x3] %v2159
        $region144: #{tpu_custom_call.1} parent=107 // pred_fallthru
          _
        // Predicated region
        $region145: #{tpu_custom_call.1} parent=107 // pred_check
          %p2165 = pneg %p597
        $region146: #{tpu_custom_call.1} parent=107 // pred_check_branch
          %2167 = sbr.rel (%p2165) target = $region148
        $region147: #{tpu_custom_call.1} parent=107 // pred_region
          %s2169 = ssub.s32 32, 32
          %2170 = vsyncadd [#allocation6], %s2169
          %s2172 = sshll.u32 [#allocation16], 4
          %s2173 = int_to_ptr.vmem [resolvable:$true] %s2172
          %2175 = dma.vmem_to_hbm [thread:$0]  %s2173, 32, %s22, [#allocation6]
        $region148: #{tpu_custom_call.1} parent=107 // pred_fallthru
          _
        // Predicated region
        $region149: #{tpu_custom_call.1} parent=107 // pred_check
          %p2176 = pneg %p597
        $region150: #{tpu_custom_call.1} parent=107 // pred_check_branch
          %2178 = sbr.rel (%p2176) target = $region152
        $region151: #{tpu_custom_call.1} parent=107 // pred_region
          %2179 = dma.done [#allocation6], 32
        $region152: #{tpu_custom_call.1} parent=107 // pred_fallthru
          _
      $region108: #{tpu_custom_call.1} parent=5 // pred_fallthru
        _
      %p2180 = scmp.le.s32.totalorder 2, %s37
      // Predicated region
      $region153: #{tpu_custom_call.1} parent=5 // pred_check
        %p2181 = pneg %p2180
      $region154: #{tpu_custom_call.1} parent=5 // pred_check_branch
        %2183 = sbr.rel (%p2181) target = $region156
      $region155: #{tpu_custom_call.1} parent=5 // pred_region
        %s2184 = ssub.s32 %s37, 2
      $region156: #{tpu_custom_call.1} parent=5 // pred_fallthru
        _
    $region6: #{tpu_custom_call.1} parent=1 // loop_footer
      %s41 = sadd.s32 1, %s37
    $region7: #{tpu_custom_call.1} parent=1 // loop_footer_branch
      %36 = sbr.rel target = $region3
    $region8: #{tpu_custom_call.1} parent=1 // loop_exit
      _
    %2185 = vsyncpa [#allocation5], 1
    %s2186 = scalar_lea.sflag [#allocation5], 1
    %2187 = vsyncpa %s2186, 1
    %2188 = vsyncpa [#allocation8], 1
    %2189 = vsyncpa [#allocation11], 1
    %s2190 = scalar_lea.sflag [#allocation11], 1
    %2191 = vsyncpa %s2190, 1
    %2192 = vsyncpa [#allocation14], 1
    %s2193 = scalar_lea.sflag [#allocation14], 1
    %2194 = vsyncpa %s2193, 1
    %2195 = vsyncpa [#allocation6], 1
    %s2196 = scalar_lea.sflag [#allocation6], 1
    %2197 = vsyncpa %s2196, 1

</llo_original>
